<compile_context>
chip_gen: v6e
topology: v6e:2x2x1
jax: 0.10.0
libtpu: 0.0.40
codegen_flags: <defaults>
</compile_context>

<pallas_src>
import functools

import jax
import jax.numpy as jnp
from jax import lax
from jax.experimental import pallas as pl
from jax.experimental.pallas import tpu as pltpu


# ----------------------------- Pallas kernel --------------------------------
def _lstm_kernel(tok_ref, embed_ref, w_ih_ref, w_hh_ref, b_ref, w_fc_ref,
                 b_fc_ref, out_ref, x_sc, *, T, B, D, H):
    """Whole forward pass (gather -> LSTM -> FC) in one kernel invocation.

    tok_ref   : (B*T,)   int32, SMEM  (row-major flatten of (B, T) tokens)
    embed_ref : (V, D)   f32, VMEM    embedding table
    w_ih_ref  : (D, 4H)  f32, VMEM    gate columns in PyTorch order (i,f,g,o)
    w_hh_ref  : (H, 4H)  f32, VMEM
    b_ref     : (1, 4H)  f32, VMEM    combined bias (b_ih + b_hh)
    w_fc_ref  : (H, C)   f32, VMEM
    b_fc_ref  : (1, C)   f32, VMEM
    out_ref   : (B, C)   f32, VMEM    logits
    x_sc      : (T*B, D) f32, VMEM    gathered, time-major embedded sequence
    """
    # ---- fused embedding gather, written directly in time-major layout ----
    # x_sc[t*B + b, :] = embed[tokens[b, t]]
    for t in range(T):
        for bb in range(B):
            r = t * B + bb
            tok = tok_ref[bb * T + t]
            x_sc[pl.ds(r, 1), :] = embed_ref[pl.ds(tok, 1), :]

    # ---- hoisted input projection + bias: one MXU matmul, kept in vregs ----
    xw = (jnp.dot(x_sc[...], w_ih_ref[...],
                  preferred_element_type=jnp.float32)
          + b_ref[...])                                          # (T*B, 4H)

    w_hh = w_hh_ref[...]                                         # loop-invariant

    # Static gate-lane mask (PyTorch order i, f, g, o): tanh lanes = [2H, 3H).
    lane = lax.broadcasted_iota(jnp.int32, (B, 4 * H), 1)
    g_mask = (lane >= 2 * H) & (lane < 3 * H)

    h = jnp.zeros((B, H), jnp.float32)
    c = jnp.zeros((B, H), jnp.float32)

    # ---- serial recurrence, fully unrolled (static t => static slices) ----
    for t in range(T):
        gates = xw[t * B:(t + 1) * B, :] + jnp.dot(
            h, w_hh, preferred_element_type=jnp.float32)         # (B, 4H)
        # Full-vreg activations blended by the static lane mask (no
        # partial-lane EUP slices on the serial chain).
        act = jnp.where(g_mask, jnp.tanh(gates), jax.nn.sigmoid(gates))
        i_g = act[:, 0 * H:1 * H]
        f_g = act[:, 1 * H:2 * H]
        g_g = act[:, 2 * H:3 * H]
        o_g = act[:, 3 * H:4 * H]
        c = f_g * c + i_g * g_g
        h = o_g * jnp.tanh(c)

    # fc(dropout(h_last)); dropout is identity in eval mode.
    logits = (jnp.dot(h, w_fc_ref[...], preferred_element_type=jnp.float32)
              + b_fc_ref[...])
    out_ref[...] = logits.astype(out_ref.dtype)


def lstm_forward_pallas(tokens, embed_w, w_ih, w_hh, b, w_fc, b_fc,
                        num_classes):
    """tokens: (B, T) int32.  Returns logits (B, C) float32."""
    B, T = tokens.shape
    V, D = embed_w.shape
    H = w_ih.shape[1] // 4
    C = num_classes

    # Row-major flatten only (no transpose): metadata-free, time-major order
    # is produced by index math inside the kernel.
    tokens_flat = tokens.reshape(B * T)

    kernel = functools.partial(_lstm_kernel, T=T, B=B, D=D, H=H)

    return pl.pallas_call(
        kernel,
        out_shape=jax.ShapeDtypeStruct((B, C), jnp.float32),
        # Grid-less: every operand is tiny and lives whole in SMEM/VMEM.
        in_specs=[
            pl.BlockSpec(memory_space=pltpu.MemorySpace.SMEM),   # tokens
            pl.BlockSpec(memory_space=pltpu.MemorySpace.VMEM),   # embed_w
            pl.BlockSpec(memory_space=pltpu.MemorySpace.VMEM),   # w_ih
            pl.BlockSpec(memory_space=pltpu.MemorySpace.VMEM),   # w_hh
            pl.BlockSpec(memory_space=pltpu.MemorySpace.VMEM),   # b
            pl.BlockSpec(memory_space=pltpu.MemorySpace.VMEM),   # w_fc
            pl.BlockSpec(memory_space=pltpu.MemorySpace.VMEM),   # b_fc
        ],
        out_specs=pl.BlockSpec(memory_space=pltpu.MemorySpace.VMEM),
        scratch_shapes=[
            pltpu.VMEM((T * B, D), jnp.float32),   # gathered time-major x
        ],
    )(tokens_flat, embed_w, w_ih, w_hh, b, w_fc, b_fc)


# --------------------------- parameter construction -------------------------
def _orthogonal(key, shape):
    """Deterministic orthogonal-ish init (mirrors nn.init.orthogonal_)."""
    rows, cols = shape
    n = max(rows, cols)
    a = jax.random.normal(key, (n, n), dtype=jnp.float32)
    q, _ = jnp.linalg.qr(a)
    return q[:rows, :cols]


def make_params(key, V, D, H, C):
    ks = jax.random.split(key, 8)
    embed_w = jax.random.normal(ks[0], (V, D), dtype=jnp.float32)

    # PyTorch stores weight_ih_l0 as (4H, D); we keep the transposed layout.
    w_ih = _orthogonal(ks[1], (4 * H, D)).T            # (D, 4H)
    w_hh = _orthogonal(ks[2], (4 * H, H)).T            # (H, 4H)

    bound = 1.0 / jnp.sqrt(H)
    b_ih = jax.random.uniform(ks[3], (4 * H,), minval=-bound, maxval=bound)
    b_hh = jax.random.uniform(ks[4], (4 * H,), minval=-bound, maxval=bound)
    # Forget-gate bias chunks set to ones in BOTH biases, matching the PyTorch
    # module's init loop (every param with 'bias' in its name), so the
    # effective combined forget bias is 2.0.
    b_ih = b_ih.at[H:2 * H].set(1.0)
    b_hh = b_hh.at[H:2 * H].set(1.0)
    b = (b_ih + b_hh).reshape(1, 4 * H).astype(jnp.float32)

    fc_bound = 1.0 / jnp.sqrt(H)
    w_fc = jax.random.uniform(ks[5], (H, C), minval=-fc_bound,
                              maxval=fc_bound).astype(jnp.float32)
    b_fc = jax.random.uniform(ks[6], (1, C), minval=-fc_bound,
                              maxval=fc_bound).astype(jnp.float32)
    return embed_w, w_ih, w_hh, b, w_fc, b_fc


# ------------------------------ pure-JAX reference ---------------------------
def lstm_forward_ref(tokens, embed_w, w_ih, w_hh, b, w_fc, b_fc, H):
    x = embed_w[tokens]                                 # (B, T, D)
    B, T, D = x.shape

    def step(carry, x_t):
        h, c = carry
        gates = x_t @ w_ih + h @ w_hh + b[0]
        i = jax.nn.sigmoid(gates[:, 0 * H:1 * H])
        f = jax.nn.sigmoid(gates[:, 1 * H:2 * H])
        g = jnp.tanh(gates[:, 2 * H:3 * H])
        o = jax.nn.sigmoid(gates[:, 3 * H:4 * H])
        c = f * c + i * g
        h = o * jnp.tanh(c)
        return (h, c), h

    h0 = jnp.zeros((B, H), jnp.float32)
    (h_last, _), _ = lax.scan(step, (h0, h0), jnp.transpose(x, (1, 0, 2)))
    return h_last @ w_fc + b_fc[0]


# ----------------------------------- main ------------------------------------
if __name__ == "__main__":
    # Config (args): num_embeddings=100, D=32, hidden_size=32, C=4,
    # rnn_layers=1, bidirectional=False, drop -> eval-mode identity.
    V, D, H, C = 100, 32, 32, 4
    B, T = 2, 8

    key = jax.random.PRNGKey(0)
    k_tok, k_par = jax.random.split(key)
    tokens = jax.random.randint(k_tok, (B, T), 0, V, dtype=jnp.int32)  # (B, T)

    embed_w, w_ih, w_hh, b, w_fc, b_fc = make_params(k_par, V, D, H, C)

    logits = lstm_forward_pallas(tokens, embed_w, w_ih, w_hh, b, w_fc, b_fc, C)
    logits = jax.block_until_ready(logits)

    ref = lstm_forward_ref(tokens, embed_w, w_ih, w_hh, b, w_fc, b_fc, H)
    assert logits.shape == (B, C)
    assert jnp.allclose(logits, ref, atol=2e-5, rtol=2e-5)

    print("KERNEL_OK")
</pallas_src>

<mosaic_0001>
module attributes {stable_mosaic.version = 11 : i64} {
  func.func @_lstm_kernel(%arg0: memref<16xi32, #tpu.memory_space<smem>>, %arg1: memref<100x32xf32, #tpu.memory_space<vmem>>, %arg2: memref<32x128xf32, #tpu.memory_space<vmem>>, %arg3: memref<32x128xf32, #tpu.memory_space<vmem>>, %arg4: memref<1x128xf32, #tpu.memory_space<vmem>>, %arg5: memref<32x4xf32, #tpu.memory_space<vmem>>, %arg6: memref<1x4xf32, #tpu.memory_space<vmem>>, %arg7: memref<2x4xf32, #tpu.memory_space<vmem>>, %arg8: memref<16x32xf32, #tpu.memory_space<vmem>>) attributes {dimension_semantics = [], scalar_prefetch = 0 : i64, scratch_operands = 1 : i64, tpu.core_type = #tpu.core_type<tc>} {
    %c0 = arith.constant 0 : index
    %0 = memref.load %arg0[%c0] : memref<16xi32, #tpu.memory_space<smem>>
    %1 = arith.index_cast %0 : i32 to index
    %c0_0 = arith.constant 0 : index
    %2 = vector.load %arg1[%1, %c0_0] : memref<100x32xf32, #tpu.memory_space<vmem>>, vector<1x32xf32>
    %c0_1 = arith.constant 0 : index
    %c0_2 = arith.constant 0 : index
    %3 = vector.load %arg8[%c0_1, %c0_2] : memref<16x32xf32, #tpu.memory_space<vmem>>, vector<1x32xf32>
    tpu.vector_store %arg8[%c0_1, %c0_2], %2 {strides = array<i32>} : memref<16x32xf32, #tpu.memory_space<vmem>>, vector<1x32xf32>,
    %c8 = arith.constant 8 : index
    %4 = memref.load %arg0[%c8] : memref<16xi32, #tpu.memory_space<smem>>
    %5 = arith.index_cast %4 : i32 to index
    %c0_3 = arith.constant 0 : index
    %6 = vector.load %arg1[%5, %c0_3] : memref<100x32xf32, #tpu.memory_space<vmem>>, vector<1x32xf32>
    %c1 = arith.constant 1 : index
    %c0_4 = arith.constant 0 : index
    %7 = vector.load %arg8[%c1, %c0_4] : memref<16x32xf32, #tpu.memory_space<vmem>>, vector<1x32xf32>
    tpu.vector_store %arg8[%c1, %c0_4], %6 {strides = array<i32>} : memref<16x32xf32, #tpu.memory_space<vmem>>, vector<1x32xf32>,
    %c1_5 = arith.constant 1 : index
    %8 = memref.load %arg0[%c1_5] : memref<16xi32, #tpu.memory_space<smem>>
    %9 = arith.index_cast %8 : i32 to index
    %c0_6 = arith.constant 0 : index
    %10 = vector.load %arg1[%9, %c0_6] : memref<100x32xf32, #tpu.memory_space<vmem>>, vector<1x32xf32>
    %c2 = arith.constant 2 : index
    %c0_7 = arith.constant 0 : index
    %11 = vector.load %arg8[%c2, %c0_7] : memref<16x32xf32, #tpu.memory_space<vmem>>, vector<1x32xf32>
    tpu.vector_store %arg8[%c2, %c0_7], %10 {strides = array<i32>} : memref<16x32xf32, #tpu.memory_space<vmem>>, vector<1x32xf32>,
    %c9 = arith.constant 9 : index
    %12 = memref.load %arg0[%c9] : memref<16xi32, #tpu.memory_space<smem>>
    %13 = arith.index_cast %12 : i32 to index
    %c0_8 = arith.constant 0 : index
    %14 = vector.load %arg1[%13, %c0_8] : memref<100x32xf32, #tpu.memory_space<vmem>>, vector<1x32xf32>
    %c3 = arith.constant 3 : index
    %c0_9 = arith.constant 0 : index
    %15 = vector.load %arg8[%c3, %c0_9] : memref<16x32xf32, #tpu.memory_space<vmem>>, vector<1x32xf32>
    tpu.vector_store %arg8[%c3, %c0_9], %14 {strides = array<i32>} : memref<16x32xf32, #tpu.memory_space<vmem>>, vector<1x32xf32>,
    %c2_10 = arith.constant 2 : index
    %16 = memref.load %arg0[%c2_10] : memref<16xi32, #tpu.memory_space<smem>>
    %17 = arith.index_cast %16 : i32 to index
    %c0_11 = arith.constant 0 : index
    %18 = vector.load %arg1[%17, %c0_11] : memref<100x32xf32, #tpu.memory_space<vmem>>, vector<1x32xf32>
    %c4 = arith.constant 4 : index
    %c0_12 = arith.constant 0 : index
    %19 = vector.load %arg8[%c4, %c0_12] : memref<16x32xf32, #tpu.memory_space<vmem>>, vector<1x32xf32>
    tpu.vector_store %arg8[%c4, %c0_12], %18 {strides = array<i32>} : memref<16x32xf32, #tpu.memory_space<vmem>>, vector<1x32xf32>,
    %c10 = arith.constant 10 : index
    %20 = memref.load %arg0[%c10] : memref<16xi32, #tpu.memory_space<smem>>
    %21 = arith.index_cast %20 : i32 to index
    %c0_13 = arith.constant 0 : index
    %22 = vector.load %arg1[%21, %c0_13] : memref<100x32xf32, #tpu.memory_space<vmem>>, vector<1x32xf32>
    %c5 = arith.constant 5 : index
    %c0_14 = arith.constant 0 : index
    %23 = vector.load %arg8[%c5, %c0_14] : memref<16x32xf32, #tpu.memory_space<vmem>>, vector<1x32xf32>
    tpu.vector_store %arg8[%c5, %c0_14], %22 {strides = array<i32>} : memref<16x32xf32, #tpu.memory_space<vmem>>, vector<1x32xf32>,
    %c3_15 = arith.constant 3 : index
    %24 = memref.load %arg0[%c3_15] : memref<16xi32, #tpu.memory_space<smem>>
    %25 = arith.index_cast %24 : i32 to index
    %c0_16 = arith.constant 0 : index
    %26 = vector.load %arg1[%25, %c0_16] : memref<100x32xf32, #tpu.memory_space<vmem>>, vector<1x32xf32>
    %c6 = arith.constant 6 : index
    %c0_17 = arith.constant 0 : index
    %27 = vector.load %arg8[%c6, %c0_17] : memref<16x32xf32, #tpu.memory_space<vmem>>, vector<1x32xf32>
    tpu.vector_store %arg8[%c6, %c0_17], %26 {strides = array<i32>} : memref<16x32xf32, #tpu.memory_space<vmem>>, vector<1x32xf32>,
    %c11 = arith.constant 11 : index
    %28 = memref.load %arg0[%c11] : memref<16xi32, #tpu.memory_space<smem>>
    %29 = arith.index_cast %28 : i32 to index
    %c0_18 = arith.constant 0 : index
    %30 = vector.load %arg1[%29, %c0_18] : memref<100x32xf32, #tpu.memory_space<vmem>>, vector<1x32xf32>
    %c7 = arith.constant 7 : index
    %c0_19 = arith.constant 0 : index
    %31 = vector.load %arg8[%c7, %c0_19] : memref<16x32xf32, #tpu.memory_space<vmem>>, vector<1x32xf32>
    tpu.vector_store %arg8[%c7, %c0_19], %30 {strides = array<i32>} : memref<16x32xf32, #tpu.memory_space<vmem>>, vector<1x32xf32>,
    %c4_20 = arith.constant 4 : index
    %32 = memref.load %arg0[%c4_20] : memref<16xi32, #tpu.memory_space<smem>>
    %33 = arith.index_cast %32 : i32 to index
    %c0_21 = arith.constant 0 : index
    %34 = vector.load %arg1[%33, %c0_21] : memref<100x32xf32, #tpu.memory_space<vmem>>, vector<1x32xf32>
    %c8_22 = arith.constant 8 : index
    %c0_23 = arith.constant 0 : index
    %35 = vector.load %arg8[%c8_22, %c0_23] : memref<16x32xf32, #tpu.memory_space<vmem>>, vector<1x32xf32>
    tpu.vector_store %arg8[%c8_22, %c0_23], %34 {strides = array<i32>} : memref<16x32xf32, #tpu.memory_space<vmem>>, vector<1x32xf32>,
    %c12 = arith.constant 12 : index
    %36 = memref.load %arg0[%c12] : memref<16xi32, #tpu.memory_space<smem>>
    %37 = arith.index_cast %36 : i32 to index
    %c0_24 = arith.constant 0 : index
    %38 = vector.load %arg1[%37, %c0_24] : memref<100x32xf32, #tpu.memory_space<vmem>>, vector<1x32xf32>
    %c9_25 = arith.constant 9 : index
    %c0_26 = arith.constant 0 : index
    %39 = vector.load %arg8[%c9_25, %c0_26] : memref<16x32xf32, #tpu.memory_space<vmem>>, vector<1x32xf32>
    tpu.vector_store %arg8[%c9_25, %c0_26], %38 {strides = array<i32>} : memref<16x32xf32, #tpu.memory_space<vmem>>, vector<1x32xf32>,
    %c5_27 = arith.constant 5 : index
    %40 = memref.load %arg0[%c5_27] : memref<16xi32, #tpu.memory_space<smem>>
    %41 = arith.index_cast %40 : i32 to index
    %c0_28 = arith.constant 0 : index
    %42 = vector.load %arg1[%41, %c0_28] : memref<100x32xf32, #tpu.memory_space<vmem>>, vector<1x32xf32>
    %c10_29 = arith.constant 10 : index
    %c0_30 = arith.constant 0 : index
    %43 = vector.load %arg8[%c10_29, %c0_30] : memref<16x32xf32, #tpu.memory_space<vmem>>, vector<1x32xf32>
    tpu.vector_store %arg8[%c10_29, %c0_30], %42 {strides = array<i32>} : memref<16x32xf32, #tpu.memory_space<vmem>>, vector<1x32xf32>,
    %c13 = arith.constant 13 : index
    %44 = memref.load %arg0[%c13] : memref<16xi32, #tpu.memory_space<smem>>
    %45 = arith.index_cast %44 : i32 to index
    %c0_31 = arith.constant 0 : index
    %46 = vector.load %arg1[%45, %c0_31] : memref<100x32xf32, #tpu.memory_space<vmem>>, vector<1x32xf32>
    %c11_32 = arith.constant 11 : index
    %c0_33 = arith.constant 0 : index
    %47 = vector.load %arg8[%c11_32, %c0_33] : memref<16x32xf32, #tpu.memory_space<vmem>>, vector<1x32xf32>
    tpu.vector_store %arg8[%c11_32, %c0_33], %46 {strides = array<i32>} : memref<16x32xf32, #tpu.memory_space<vmem>>, vector<1x32xf32>,
    %c6_34 = arith.constant 6 : index
    %48 = memref.load %arg0[%c6_34] : memref<16xi32, #tpu.memory_space<smem>>
    %49 = arith.index_cast %48 : i32 to index
    %c0_35 = arith.constant 0 : index
    %50 = vector.load %arg1[%49, %c0_35] : memref<100x32xf32, #tpu.memory_space<vmem>>, vector<1x32xf32>
    %c12_36 = arith.constant 12 : index
    %c0_37 = arith.constant 0 : index
    %51 = vector.load %arg8[%c12_36, %c0_37] : memref<16x32xf32, #tpu.memory_space<vmem>>, vector<1x32xf32>
    tpu.vector_store %arg8[%c12_36, %c0_37], %50 {strides = array<i32>} : memref<16x32xf32, #tpu.memory_space<vmem>>, vector<1x32xf32>,
    %c14 = arith.constant 14 : index
    %52 = memref.load %arg0[%c14] : memref<16xi32, #tpu.memory_space<smem>>
    %53 = arith.index_cast %52 : i32 to index
    %c0_38 = arith.constant 0 : index
    %54 = vector.load %arg1[%53, %c0_38] : memref<100x32xf32, #tpu.memory_space<vmem>>, vector<1x32xf32>
    %c13_39 = arith.constant 13 : index
    %c0_40 = arith.constant 0 : index
    %55 = vector.load %arg8[%c13_39, %c0_40] : memref<16x32xf32, #tpu.memory_space<vmem>>, vector<1x32xf32>
    tpu.vector_store %arg8[%c13_39, %c0_40], %54 {strides = array<i32>} : memref<16x32xf32, #tpu.memory_space<vmem>>, vector<1x32xf32>,
    %c7_41 = arith.constant 7 : index
    %56 = memref.load %arg0[%c7_41] : memref<16xi32, #tpu.memory_space<smem>>
    %57 = arith.index_cast %56 : i32 to index
    %c0_42 = arith.constant 0 : index
    %58 = vector.load %arg1[%57, %c0_42] : memref<100x32xf32, #tpu.memory_space<vmem>>, vector<1x32xf32>
    %c14_43 = arith.constant 14 : index
    %c0_44 = arith.constant 0 : index
    %59 = vector.load %arg8[%c14_43, %c0_44] : memref<16x32xf32, #tpu.memory_space<vmem>>, vector<1x32xf32>
    tpu.vector_store %arg8[%c14_43, %c0_44], %58 {strides = array<i32>} : memref<16x32xf32, #tpu.memory_space<vmem>>, vector<1x32xf32>,
    %c15 = arith.constant 15 : index
    %60 = memref.load %arg0[%c15] : memref<16xi32, #tpu.memory_space<smem>>
    %61 = arith.index_cast %60 : i32 to index
    %c0_45 = arith.constant 0 : index
    %62 = vector.load %arg1[%61, %c0_45] : memref<100x32xf32, #tpu.memory_space<vmem>>, vector<1x32xf32>
    %c15_46 = arith.constant 15 : index
    %c0_47 = arith.constant 0 : index
    %63 = vector.load %arg8[%c15_46, %c0_47] : memref<16x32xf32, #tpu.memory_space<vmem>>, vector<1x32xf32>
    tpu.vector_store %arg8[%c15_46, %c0_47], %62 {strides = array<i32>} : memref<16x32xf32, #tpu.memory_space<vmem>>, vector<1x32xf32>,
    %c0_48 = arith.constant 0 : index
    %c0_49 = arith.constant 0 : index
    %64 = vector.load %arg8[%c0_48, %c0_49] : memref<16x32xf32, #tpu.memory_space<vmem>>, vector<16x32xf32>
    %c0_50 = arith.constant 0 : index
    %c0_51 = arith.constant 0 : index
    %65 = vector.load %arg2[%c0_50, %c0_51] : memref<32x128xf32, #tpu.memory_space<vmem>>, vector<32x128xf32>
    %cst = arith.constant dense<0.000000e+00> : vector<16x128xf32>
    %66 = tpu.matmul %64, %65, %cst {dimension_numbers = #tpu.dot_dimension_numbers<[1], [0], [0], [1], [0, 0, 1, 1], [], []>} : vector<16x32xf32>, vector<32x128xf32>, vector<16x128xf32> -> vector<16x128xf32>
    %c0_52 = arith.constant 0 : index
    %c0_53 = arith.constant 0 : index
    %67 = vector.load %arg4[%c0_52, %c0_53] : memref<1x128xf32, #tpu.memory_space<vmem>>, vector<1x128xf32>
    %68 = vector.broadcast %67 : vector<1x128xf32> to vector<16x128xf32>
    %69 = arith.addf %66, %68 : vector<16x128xf32>
    %c0_54 = arith.constant 0 : index
    %c0_55 = arith.constant 0 : index
    %70 = vector.load %arg3[%c0_54, %c0_55] : memref<32x128xf32, #tpu.memory_space<vmem>>, vector<32x128xf32>
    %71 = tpu.iota {dimensions = array<i32: 1>} : vector<2x128xi32>
    %c64_i32 = arith.constant 64 : i32
    %72 = vector.broadcast %c64_i32 : i32 to vector<2x128xi32>
    %73 = arith.cmpi sge, %71, %72 : vector<2x128xi32>
    %c96_i32 = arith.constant 96 : i32
    %74 = vector.broadcast %c96_i32 : i32 to vector<2x128xi32>
    %75 = arith.cmpi slt, %71, %74 : vector<2x128xi32>
    %76 = arith.andi %73, %75 : vector<2x128xi1>
    %cst_56 = arith.constant 0.000000e+00 : f32
    %77 = vector.broadcast %cst_56 : f32 to vector<2x32xf32>
    %cst_57 = arith.constant 0.000000e+00 : f32
    %78 = vector.broadcast %cst_57 : f32 to vector<2x32xf32>
    %79 = vector.extract_strided_slice %69 {offsets = [0, 0], sizes = [2, 128], strides = [1, 1]} : vector<16x128xf32> to vector<2x128xf32>
    %cst_58 = arith.constant dense<0.000000e+00> : vector<2x128xf32>
    %80 = tpu.matmul %77, %70, %cst_58 {dimension_numbers = #tpu.dot_dimension_numbers<[1], [0], [0], [1], [0, 0, 1, 1], [], []>} : vector<2x32xf32>, vector<32x128xf32>, vector<2x128xf32> -> vector<2x128xf32>
    %81 = arith.addf %79, %80 : vector<2x128xf32>
    %82 = math.tanh %81 : vector<2x128xf32>
    %83 = arith.negf %81 : vector<2x128xf32>
    %84 = math.exp %83 : vector<2x128xf32>
    %cst_59 = arith.constant 1.000000e+00 : f32
    %85 = vector.broadcast %cst_59 : f32 to vector<2x128xf32>
    %86 = arith.addf %85, %84 : vector<2x128xf32>
    %87 = arith.divf %85, %86 : vector<2x128xf32>
    %88 = arith.select %76, %82, %87 : vector<2x128xi1>, vector<2x128xf32>
    %89 = vector.extract_strided_slice %88 {offsets = [0, 0], sizes = [2, 32], strides = [1, 1]} : vector<2x128xf32> to vector<2x32xf32>
    %90 = vector.extract_strided_slice %88 {offsets = [0, 32], sizes = [2, 32], strides = [1, 1]} : vector<2x128xf32> to vector<2x32xf32>
    %91 = vector.extract_strided_slice %88 {offsets = [0, 64], sizes = [2, 32], strides = [1, 1]} : vector<2x128xf32> to vector<2x32xf32>
    %92 = vector.extract_strided_slice %88 {offsets = [0, 96], sizes = [2, 32], strides = [1, 1]} : vector<2x128xf32> to vector<2x32xf32>
    %93 = arith.mulf %90, %78 : vector<2x32xf32>
    %94 = arith.mulf %89, %91 : vector<2x32xf32>
    %95 = arith.addf %93, %94 : vector<2x32xf32>
    %96 = math.tanh %95 : vector<2x32xf32>
    %97 = arith.mulf %92, %96 : vector<2x32xf32>
    %98 = vector.extract_strided_slice %69 {offsets = [2, 0], sizes = [2, 128], strides = [1, 1]} : vector<16x128xf32> to vector<2x128xf32>
    %cst_60 = arith.constant dense<0.000000e+00> : vector<2x128xf32>
    %99 = tpu.matmul %97, %70, %cst_60 {dimension_numbers = #tpu.dot_dimension_numbers<[1], [0], [0], [1], [0, 0, 1, 1], [], []>} : vector<2x32xf32>, vector<32x128xf32>, vector<2x128xf32> -> vector<2x128xf32>
    %100 = arith.addf %98, %99 : vector<2x128xf32>
    %101 = math.tanh %100 : vector<2x128xf32>
    %102 = arith.negf %100 : vector<2x128xf32>
    %103 = math.exp %102 : vector<2x128xf32>
    %cst_61 = arith.constant 1.000000e+00 : f32
    %104 = vector.broadcast %cst_61 : f32 to vector<2x128xf32>
    %105 = arith.addf %104, %103 : vector<2x128xf32>
    %106 = arith.divf %104, %105 : vector<2x128xf32>
    %107 = arith.select %76, %101, %106 : vector<2x128xi1>, vector<2x128xf32>
    %108 = vector.extract_strided_slice %107 {offsets = [0, 0], sizes = [2, 32], strides = [1, 1]} : vector<2x128xf32> to vector<2x32xf32>
    %109 = vector.extract_strided_slice %107 {offsets = [0, 32], sizes = [2, 32], strides = [1, 1]} : vector<2x128xf32> to vector<2x32xf32>
    %110 = vector.extract_strided_slice %107 {offsets = [0, 64], sizes = [2, 32], strides = [1, 1]} : vector<2x128xf32> to vector<2x32xf32>
    %111 = vector.extract_strided_slice %107 {offsets = [0, 96], sizes = [2, 32], strides = [1, 1]} : vector<2x128xf32> to vector<2x32xf32>
    %112 = arith.mulf %109, %95 : vector<2x32xf32>
    %113 = arith.mulf %108, %110 : vector<2x32xf32>
    %114 = arith.addf %112, %113 : vector<2x32xf32>
    %115 = math.tanh %114 : vector<2x32xf32>
    %116 = arith.mulf %111, %115 : vector<2x32xf32>
    %117 = vector.extract_strided_slice %69 {offsets = [4, 0], sizes = [2, 128], strides = [1, 1]} : vector<16x128xf32> to vector<2x128xf32>
    %cst_62 = arith.constant dense<0.000000e+00> : vector<2x128xf32>
    %118 = tpu.matmul %116, %70, %cst_62 {dimension_numbers = #tpu.dot_dimension_numbers<[1], [0], [0], [1], [0, 0, 1, 1], [], []>} : vector<2x32xf32>, vector<32x128xf32>, vector<2x128xf32> -> vector<2x128xf32>
    %119 = arith.addf %117, %118 : vector<2x128xf32>
    %120 = math.tanh %119 : vector<2x128xf32>
    %121 = arith.negf %119 : vector<2x128xf32>
    %122 = math.exp %121 : vector<2x128xf32>
    %cst_63 = arith.constant 1.000000e+00 : f32
    %123 = vector.broadcast %cst_63 : f32 to vector<2x128xf32>
    %124 = arith.addf %123, %122 : vector<2x128xf32>
    %125 = arith.divf %123, %124 : vector<2x128xf32>
    %126 = arith.select %76, %120, %125 : vector<2x128xi1>, vector<2x128xf32>
    %127 = vector.extract_strided_slice %126 {offsets = [0, 0], sizes = [2, 32], strides = [1, 1]} : vector<2x128xf32> to vector<2x32xf32>
    %128 = vector.extract_strided_slice %126 {offsets = [0, 32], sizes = [2, 32], strides = [1, 1]} : vector<2x128xf32> to vector<2x32xf32>
    %129 = vector.extract_strided_slice %126 {offsets = [0, 64], sizes = [2, 32], strides = [1, 1]} : vector<2x128xf32> to vector<2x32xf32>
    %130 = vector.extract_strided_slice %126 {offsets = [0, 96], sizes = [2, 32], strides = [1, 1]} : vector<2x128xf32> to vector<2x32xf32>
    %131 = arith.mulf %128, %114 : vector<2x32xf32>
    %132 = arith.mulf %127, %129 : vector<2x32xf32>
    %133 = arith.addf %131, %132 : vector<2x32xf32>
    %134 = math.tanh %133 : vector<2x32xf32>
    %135 = arith.mulf %130, %134 : vector<2x32xf32>
    %136 = vector.extract_strided_slice %69 {offsets = [6, 0], sizes = [2, 128], strides = [1, 1]} : vector<16x128xf32> to vector<2x128xf32>
    %cst_64 = arith.constant dense<0.000000e+00> : vector<2x128xf32>
    %137 = tpu.matmul %135, %70, %cst_64 {dimension_numbers = #tpu.dot_dimension_numbers<[1], [0], [0], [1], [0, 0, 1, 1], [], []>} : vector<2x32xf32>, vector<32x128xf32>, vector<2x128xf32> -> vector<2x128xf32>
    %138 = arith.addf %136, %137 : vector<2x128xf32>
    %139 = math.tanh %138 : vector<2x128xf32>
    %140 = arith.negf %138 : vector<2x128xf32>
    %141 = math.exp %140 : vector<2x128xf32>
    %cst_65 = arith.constant 1.000000e+00 : f32
    %142 = vector.broadcast %cst_65 : f32 to vector<2x128xf32>
    %143 = arith.addf %142, %141 : vector<2x128xf32>
    %144 = arith.divf %142, %143 : vector<2x128xf32>
    %145 = arith.select %76, %139, %144 : vector<2x128xi1>, vector<2x128xf32>
    %146 = vector.extract_strided_slice %145 {offsets = [0, 0], sizes = [2, 32], strides = [1, 1]} : vector<2x128xf32> to vector<2x32xf32>
    %147 = vector.extract_strided_slice %145 {offsets = [0, 32], sizes = [2, 32], strides = [1, 1]} : vector<2x128xf32> to vector<2x32xf32>
    %148 = vector.extract_strided_slice %145 {offsets = [0, 64], sizes = [2, 32], strides = [1, 1]} : vector<2x128xf32> to vector<2x32xf32>
    %149 = vector.extract_strided_slice %145 {offsets = [0, 96], sizes = [2, 32], strides = [1, 1]} : vector<2x128xf32> to vector<2x32xf32>
    %150 = arith.mulf %147, %133 : vector<2x32xf32>
    %151 = arith.mulf %146, %148 : vector<2x32xf32>
    %152 = arith.addf %150, %151 : vector<2x32xf32>
    %153 = math.tanh %152 : vector<2x32xf32>
    %154 = arith.mulf %149, %153 : vector<2x32xf32>
    %155 = vector.extract_strided_slice %69 {offsets = [8, 0], sizes = [2, 128], strides = [1, 1]} : vector<16x128xf32> to vector<2x128xf32>
    %cst_66 = arith.constant dense<0.000000e+00> : vector<2x128xf32>
    %156 = tpu.matmul %154, %70, %cst_66 {dimension_numbers = #tpu.dot_dimension_numbers<[1], [0], [0], [1], [0, 0, 1, 1], [], []>} : vector<2x32xf32>, vector<32x128xf32>, vector<2x128xf32> -> vector<2x128xf32>
    %157 = arith.addf %155, %156 : vector<2x128xf32>
    %158 = math.tanh %157 : vector<2x128xf32>
    %159 = arith.negf %157 : vector<2x128xf32>
    %160 = math.exp %159 : vector<2x128xf32>
    %cst_67 = arith.constant 1.000000e+00 : f32
    %161 = vector.broadcast %cst_67 : f32 to vector<2x128xf32>
    %162 = arith.addf %161, %160 : vector<2x128xf32>
    %163 = arith.divf %161, %162 : vector<2x128xf32>
    %164 = arith.select %76, %158, %163 : vector<2x128xi1>, vector<2x128xf32>
    %165 = vector.extract_strided_slice %164 {offsets = [0, 0], sizes = [2, 32], strides = [1, 1]} : vector<2x128xf32> to vector<2x32xf32>
    %166 = vector.extract_strided_slice %164 {offsets = [0, 32], sizes = [2, 32], strides = [1, 1]} : vector<2x128xf32> to vector<2x32xf32>
    %167 = vector.extract_strided_slice %164 {offsets = [0, 64], sizes = [2, 32], strides = [1, 1]} : vector<2x128xf32> to vector<2x32xf32>
    %168 = vector.extract_strided_slice %164 {offsets = [0, 96], sizes = [2, 32], strides = [1, 1]} : vector<2x128xf32> to vector<2x32xf32>
    %169 = arith.mulf %166, %152 : vector<2x32xf32>
    %170 = arith.mulf %165, %167 : vector<2x32xf32>
    %171 = arith.addf %169, %170 : vector<2x32xf32>
    %172 = math.tanh %171 : vector<2x32xf32>
    %173 = arith.mulf %168, %172 : vector<2x32xf32>
    %174 = vector.extract_strided_slice %69 {offsets = [10, 0], sizes = [2, 128], strides = [1, 1]} : vector<16x128xf32> to vector<2x128xf32>
    %cst_68 = arith.constant dense<0.000000e+00> : vector<2x128xf32>
    %175 = tpu.matmul %173, %70, %cst_68 {dimension_numbers = #tpu.dot_dimension_numbers<[1], [0], [0], [1], [0, 0, 1, 1], [], []>} : vector<2x32xf32>, vector<32x128xf32>, vector<2x128xf32> -> vector<2x128xf32>
    %176 = arith.addf %174, %175 : vector<2x128xf32>
    %177 = math.tanh %176 : vector<2x128xf32>
    %178 = arith.negf %176 : vector<2x128xf32>
    %179 = math.exp %178 : vector<2x128xf32>
    %cst_69 = arith.constant 1.000000e+00 : f32
    %180 = vector.broadcast %cst_69 : f32 to vector<2x128xf32>
    %181 = arith.addf %180, %179 : vector<2x128xf32>
    %182 = arith.divf %180, %181 : vector<2x128xf32>
    %183 = arith.select %76, %177, %182 : vector<2x128xi1>, vector<2x128xf32>
    %184 = vector.extract_strided_slice %183 {offsets = [0, 0], sizes = [2, 32], strides = [1, 1]} : vector<2x128xf32> to vector<2x32xf32>
    %185 = vector.extract_strided_slice %183 {offsets = [0, 32], sizes = [2, 32], strides = [1, 1]} : vector<2x128xf32> to vector<2x32xf32>
    %186 = vector.extract_strided_slice %183 {offsets = [0, 64], sizes = [2, 32], strides = [1, 1]} : vector<2x128xf32> to vector<2x32xf32>
    %187 = vector.extract_strided_slice %183 {offsets = [0, 96], sizes = [2, 32], strides = [1, 1]} : vector<2x128xf32> to vector<2x32xf32>
    %188 = arith.mulf %185, %171 : vector<2x32xf32>
    %189 = arith.mulf %184, %186 : vector<2x32xf32>
    %190 = arith.addf %188, %189 : vector<2x32xf32>
    %191 = math.tanh %190 : vector<2x32xf32>
    %192 = arith.mulf %187, %191 : vector<2x32xf32>
    %193 = vector.extract_strided_slice %69 {offsets = [12, 0], sizes = [2, 128], strides = [1, 1]} : vector<16x128xf32> to vector<2x128xf32>
    %cst_70 = arith.constant dense<0.000000e+00> : vector<2x128xf32>
    %194 = tpu.matmul %192, %70, %cst_70 {dimension_numbers = #tpu.dot_dimension_numbers<[1], [0], [0], [1], [0, 0, 1, 1], [], []>} : vector<2x32xf32>, vector<32x128xf32>, vector<2x128xf32> -> vector<2x128xf32>
    %195 = arith.addf %193, %194 : vector<2x128xf32>
    %196 = math.tanh %195 : vector<2x128xf32>
    %197 = arith.negf %195 : vector<2x128xf32>
    %198 = math.exp %197 : vector<2x128xf32>
    %cst_71 = arith.constant 1.000000e+00 : f32
    %199 = vector.broadcast %cst_71 : f32 to vector<2x128xf32>
    %200 = arith.addf %199, %198 : vector<2x128xf32>
    %201 = arith.divf %199, %200 : vector<2x128xf32>
    %202 = arith.select %76, %196, %201 : vector<2x128xi1>, vector<2x128xf32>
    %203 = vector.extract_strided_slice %202 {offsets = [0, 0], sizes = [2, 32], strides = [1, 1]} : vector<2x128xf32> to vector<2x32xf32>
    %204 = vector.extract_strided_slice %202 {offsets = [0, 32], sizes = [2, 32], strides = [1, 1]} : vector<2x128xf32> to vector<2x32xf32>
    %205 = vector.extract_strided_slice %202 {offsets = [0, 64], sizes = [2, 32], strides = [1, 1]} : vector<2x128xf32> to vector<2x32xf32>
    %206 = vector.extract_strided_slice %202 {offsets = [0, 96], sizes = [2, 32], strides = [1, 1]} : vector<2x128xf32> to vector<2x32xf32>
    %207 = arith.mulf %204, %190 : vector<2x32xf32>
    %208 = arith.mulf %203, %205 : vector<2x32xf32>
    %209 = arith.addf %207, %208 : vector<2x32xf32>
    %210 = math.tanh %209 : vector<2x32xf32>
    %211 = arith.mulf %206, %210 : vector<2x32xf32>
    %212 = vector.extract_strided_slice %69 {offsets = [14, 0], sizes = [2, 128], strides = [1, 1]} : vector<16x128xf32> to vector<2x128xf32>
    %cst_72 = arith.constant dense<0.000000e+00> : vector<2x128xf32>
    %213 = tpu.matmul %211, %70, %cst_72 {dimension_numbers = #tpu.dot_dimension_numbers<[1], [0], [0], [1], [0, 0, 1, 1], [], []>} : vector<2x32xf32>, vector<32x128xf32>, vector<2x128xf32> -> vector<2x128xf32>
    %214 = arith.addf %212, %213 : vector<2x128xf32>
    %215 = math.tanh %214 : vector<2x128xf32>
    %216 = arith.negf %214 : vector<2x128xf32>
    %217 = math.exp %216 : vector<2x128xf32>
    %cst_73 = arith.constant 1.000000e+00 : f32
    %218 = vector.broadcast %cst_73 : f32 to vector<2x128xf32>
    %219 = arith.addf %218, %217 : vector<2x128xf32>
    %220 = arith.divf %218, %219 : vector<2x128xf32>
    %221 = arith.select %76, %215, %220 : vector<2x128xi1>, vector<2x128xf32>
    %222 = vector.extract_strided_slice %221 {offsets = [0, 0], sizes = [2, 32], strides = [1, 1]} : vector<2x128xf32> to vector<2x32xf32>
    %223 = vector.extract_strided_slice %221 {offsets = [0, 32], sizes = [2, 32], strides = [1, 1]} : vector<2x128xf32> to vector<2x32xf32>
    %224 = vector.extract_strided_slice %221 {offsets = [0, 64], sizes = [2, 32], strides = [1, 1]} : vector<2x128xf32> to vector<2x32xf32>
    %225 = vector.extract_strided_slice %221 {offsets = [0, 96], sizes = [2, 32], strides = [1, 1]} : vector<2x128xf32> to vector<2x32xf32>
    %226 = arith.mulf %223, %209 : vector<2x32xf32>
    %227 = arith.mulf %222, %224 : vector<2x32xf32>
    %228 = arith.addf %226, %227 : vector<2x32xf32>
    %229 = math.tanh %228 : vector<2x32xf32>
    %230 = arith.mulf %225, %229 : vector<2x32xf32>
    %c0_74 = arith.constant 0 : index
    %c0_75 = arith.constant 0 : index
    %231 = vector.load %arg5[%c0_74, %c0_75] : memref<32x4xf32, #tpu.memory_space<vmem>>, vector<32x4xf32>
    %cst_76 = arith.constant dense<0.000000e+00> : vector<2x4xf32>
    %232 = tpu.matmul %230, %231, %cst_76 {dimension_numbers = #tpu.dot_dimension_numbers<[1], [0], [0], [1], [0, 0, 1, 1], [], []>} : vector<2x32xf32>, vector<32x4xf32>, vector<2x4xf32> -> vector<2x4xf32>
    %c0_77 = arith.constant 0 : index
    %c0_78 = arith.constant 0 : index
    %233 = vector.load %arg6[%c0_77, %c0_78] : memref<1x4xf32, #tpu.memory_space<vmem>>, vector<1x4xf32>
    %234 = vector.broadcast %233 : vector<1x4xf32> to vector<2x4xf32>
    %235 = arith.addf %232, %234 : vector<2x4xf32>
    %c0_79 = arith.constant 0 : index
    %c0_80 = arith.constant 0 : index
    %236 = vector.load %arg7[%c0_79, %c0_80] : memref<2x4xf32, #tpu.memory_space<vmem>>, vector<2x4xf32>
    tpu.vector_store %arg7[%c0_79, %c0_80], %235 {strides = array<i32>} : memref<2x4xf32, #tpu.memory_space<vmem>>, vector<2x4xf32>,
    return
  }
}

</mosaic_0001>

<llo_original>
// kernel: tpu_custom_call.1
$region0: #{tpu_custom_call.1}
  #allocation0 [shape = 'u32[]', space=smem, size = 0x4, offset = 0x4, fixed_abs, tag = 'smem constant byte address 0x4 - core index']
  #allocation1 [shape = 'u32[144,128]{1,0:T(1,128)}', space=vmem, size = 0x12000, scoped, tag = 'internal scratch']
  #allocation2 [shape = 'f32[16,32]{1,0:T(8,128)}', space=vmem, size = 0x2000, scoped, tag = 'scratch operand']
  %s0 = inlined_call_operand.vmem [shape: s32[16], index: 0, kind: input, shape index: {}]
  %s1 = inlined_call_operand.vmem [shape: f32[100,32], index: 1, kind: input, shape index: {}]
  %s2 = inlined_call_operand.vmem [shape: f32[32,128], index: 2, kind: input, shape index: {}]
  %s3 = inlined_call_operand.vmem [shape: f32[32,128], index: 3, kind: input, shape index: {}]
  %s4 = inlined_call_operand.vmem [shape: f32[1,128], index: 4, kind: input, shape index: {}]
  %s5 = inlined_call_operand.vmem [shape: f32[32,4], index: 5, kind: input, shape index: {}]
  %s6 = inlined_call_operand.vmem [shape: f32[1,4], index: 6, kind: input, shape index: {}]
  %s7 = inlined_call_operand.hbm [shape: f32[2,4], index: 7, kind: output, shape index: {}]
  %s8 = sld [smem:[#allocation0]]
  $region42: #{tpu_custom_call.1} parent=0
    _
  %s10 = ssub.s32 1, %s8
  %s11 = scalar_select 0, %s10, %s8
  $region1: #{tpu_custom_call.1} parent=0
    #allocation3 [shape = 'u8[512]{0}', space=smem, size = 0x200, scoped, tag = 'input window, operand 0, single buffered']
    #allocation4 [shape = 's32[1]{0}', space=sflag, size = 0x4, scoped, tag = 'scoped memory for tpu_custom_call.1']
    #allocation5 [shape = 's32[1]{0}', space=sflag, size = 0x4, scoped, tag = 'scoped memory for tpu_custom_call.1']
    #allocation6 [shape = 'u8[1024]{0}', space=vmem, size = 0x400, scoped, tag = 'output window, operand 0, single buffered']
    %12 = vsyncpa [#allocation5], 0
    %13 = vsyncpa [#allocation4], 0
    // Predicated region
    $region2: #{tpu_custom_call.1} parent=1 // pred_check
      _
    $region3: #{tpu_custom_call.1} parent=1 // pred_check_branch
      %15 = sbr.rel (0) target = $region5
    $region4: #{tpu_custom_call.1} parent=1 // pred_region
      %s17 = ssub.s32 16, 16
      %18 = vsyncadd [#allocation5], %s17
      %s20 = sshll.u32 %s0, 4
      %s21 = int_to_ptr.vmem [resolvable:$true] %s20
      %23 = dma.vmem_to_smem %s21, 16, [#allocation3], [#allocation5]
    $region5: #{tpu_custom_call.1} parent=1 // pred_fallthru
      _
    // Predicated region
    $region6: #{tpu_custom_call.1} parent=1 // pred_check
      _
    $region7: #{tpu_custom_call.1} parent=1 // pred_check_branch
      %25 = sbr.rel (0) target = $region9
    $region8: #{tpu_custom_call.1} parent=1 // pred_region
      _
    $region9: #{tpu_custom_call.1} parent=1 // pred_fallthru
      _
    // Predicated region
    $region10: #{tpu_custom_call.1} parent=1 // pred_check
      _
    $region11: #{tpu_custom_call.1} parent=1 // pred_check_branch
      %27 = sbr.rel (0) target = $region13
    $region12: #{tpu_custom_call.1} parent=1 // pred_region
      _
    $region13: #{tpu_custom_call.1} parent=1 // pred_fallthru
      _
    // Predicated region
    $region14: #{tpu_custom_call.1} parent=1 // pred_check
      _
    $region15: #{tpu_custom_call.1} parent=1 // pred_check_branch
      %29 = sbr.rel (0) target = $region17
    $region16: #{tpu_custom_call.1} parent=1 // pred_region
      _
    $region17: #{tpu_custom_call.1} parent=1 // pred_fallthru
      _
    // Predicated region
    $region18: #{tpu_custom_call.1} parent=1 // pred_check
      _
    $region19: #{tpu_custom_call.1} parent=1 // pred_check_branch
      %31 = sbr.rel (0) target = $region21
    $region20: #{tpu_custom_call.1} parent=1 // pred_region
      _
    $region21: #{tpu_custom_call.1} parent=1 // pred_fallthru
      _
    // Predicated region
    $region22: #{tpu_custom_call.1} parent=1 // pred_check
      _
    $region23: #{tpu_custom_call.1} parent=1 // pred_check_branch
      %33 = sbr.rel (0) target = $region25
    $region24: #{tpu_custom_call.1} parent=1 // pred_region
      _
    $region25: #{tpu_custom_call.1} parent=1 // pred_fallthru
      _
    // Predicated region
    $region26: #{tpu_custom_call.1} parent=1 // pred_check
      _
    $region27: #{tpu_custom_call.1} parent=1 // pred_check_branch
      %35 = sbr.rel (0) target = $region29
    $region28: #{tpu_custom_call.1} parent=1 // pred_region
      _
    $region29: #{tpu_custom_call.1} parent=1 // pred_fallthru
      _
    // Predicated region
    $region30: #{tpu_custom_call.1} parent=1 // pred_check
      _
    $region31: #{tpu_custom_call.1} parent=1 // pred_check_branch
      %37 = sbr.rel (0) target = $region33
    $region32: #{tpu_custom_call.1} parent=1 // pred_region
      %38 = dma.done [#allocation5], 16
    $region33: #{tpu_custom_call.1} parent=1 // pred_fallthru
      _
    %39 = sfence
    %s40 = sld [smem:[#allocation3]]
    %s41 = scalar_lea.vmem %s1, %s40
    %v42 = vld [vmem:[%s41] sm:$0x1]
    %vm43 = vcmask 253952
    %44 = vst.msk [vmem:[#allocation2] sm:$0x1] %vm43, %v42
    %s45 = sld [smem:[#allocation3 + $0x8]]
    %s46 = scalar_lea.vmem %s1, %s45
    %v47 = vld [vmem:[%s46] sm:$0x1]
    %48 = vst.msk [vmem:[#allocation2 + $0x1] sm:$0x1] %vm43, %v47
    %s49 = sld [smem:[#allocation3 + $0x1]]
    %s50 = scalar_lea.vmem %s1, %s49
    %v51 = vld [vmem:[%s50] sm:$0x1]
    %52 = vst.msk [vmem:[#allocation2 + $0x2] sm:$0x1] %vm43, %v51
    %s53 = sld [smem:[#allocation3 + $0x9]]
    %s54 = scalar_lea.vmem %s1, %s53
    %v55 = vld [vmem:[%s54] sm:$0x1]
    %56 = vst.msk [vmem:[#allocation2 + $0x3] sm:$0x1] %vm43, %v55
    %s57 = sld [smem:[#allocation3 + $0x2]]
    %s58 = scalar_lea.vmem %s1, %s57
    %v59 = vld [vmem:[%s58] sm:$0x1]
    %60 = vst.msk [vmem:[#allocation2 + $0x4] sm:$0x1] %vm43, %v59
    %s61 = sld [smem:[#allocation3 + $0xa]]
    %s62 = scalar_lea.vmem %s1, %s61
    %v63 = vld [vmem:[%s62] sm:$0x1]
    %64 = vst.msk [vmem:[#allocation2 + $0x5] sm:$0x1] %vm43, %v63
    %s65 = sld [smem:[#allocation3 + $0x3]]
    %s66 = scalar_lea.vmem %s1, %s65
    %v67 = vld [vmem:[%s66] sm:$0x1]
    %68 = vst.msk [vmem:[#allocation2 + $0x6] sm:$0x1] %vm43, %v67
    %s69 = sld [smem:[#allocation3 + $0xb]]
    %s70 = scalar_lea.vmem %s1, %s69
    %v71 = vld [vmem:[%s70] sm:$0x1]
    %72 = vst.msk [vmem:[#allocation2 + $0x7] sm:$0x1] %vm43, %v71
    %s73 = sld [smem:[#allocation3 + $0x4]]
    %s74 = scalar_lea.vmem %s1, %s73
    %v75 = vld [vmem:[%s74] sm:$0x1]
    %76 = vst.msk [vmem:[#allocation2 + $0x8] sm:$0x1] %vm43, %v75
    %s77 = sld [smem:[#allocation3 + $0xc]]
    %s78 = scalar_lea.vmem %s1, %s77
    %v79 = vld [vmem:[%s78] sm:$0x1]
    %80 = vst.msk [vmem:[#allocation2 + $0x9] sm:$0x1] %vm43, %v79
    %s81 = sld [smem:[#allocation3 + $0x5]]
    %s82 = scalar_lea.vmem %s1, %s81
    %v83 = vld [vmem:[%s82] sm:$0x1]
    %84 = vst.msk [vmem:[#allocation2 + $0xa] sm:$0x1] %vm43, %v83
    %s85 = sld [smem:[#allocation3 + $0xd]]
    %s86 = scalar_lea.vmem %s1, %s85
    %v87 = vld [vmem:[%s86] sm:$0x1]
    %88 = vst.msk [vmem:[#allocation2 + $0xb] sm:$0x1] %vm43, %v87
    %s89 = sld [smem:[#allocation3 + $0x6]]
    %s90 = scalar_lea.vmem %s1, %s89
    %v91 = vld [vmem:[%s90] sm:$0x1]
    %92 = vst.msk [vmem:[#allocation2 + $0xc] sm:$0x1] %vm43, %v91
    %s93 = sld [smem:[#allocation3 + $0xe]]
    %s94 = scalar_lea.vmem %s1, %s93
    %v95 = vld [vmem:[%s94] sm:$0x1]
    %96 = vst.msk [vmem:[#allocation2 + $0xd] sm:$0x1] %vm43, %v95
    %s97 = sld [smem:[#allocation3 + $0x7]]
    %s98 = scalar_lea.vmem %s1, %s97
    %v99 = vld [vmem:[%s98] sm:$0x1]
    %100 = vst.msk [vmem:[#allocation2 + $0xe] sm:$0x1] %vm43, %v99
    %s101 = sld [smem:[#allocation3 + $0xf]]
    %s102 = scalar_lea.vmem %s1, %s101
    %v103 = vld [vmem:[%s102] sm:$0x1]
    %104 = vst.msk [vmem:[#allocation2 + $0xf] sm:$0x1] %vm43, %v103
    %v105 = vld [vmem:[#allocation2] sm:$0xff]
    %v106 = vld [vmem:[#allocation2 + $0x8] sm:$0xff]
    %v107 = vld [vmem:[%s2] sm:$0xff]
    %v108 = vld [vmem:[%s2 + $0x8] sm:$0xff]
    %v109 = vld [vmem:[%s2 + $0x10] sm:$0xff]
    %v110 = vld [vmem:[%s2 + $0x18] sm:$0xff]
    %v111 = vld [vmem:[%s4] sm:$0x1]
    %v113 = vlaneseq
    %v114 = vshrl.u32 %v113, 7
    %v115 = vsub.s32 0, %v114
    %v116 = vrot.slane %v111, %v115
    %vm118 = vcmask 261120
    %v120 = vsel %vm118, %v105, 0
    %v123 = vsel %vm118, %v106, 0
    %125 = vmatprep.subr.mxu0 0.0
    %126 = vmatpush1.msra.mxu0 0.0
    %127 = vmatprep.subr.mxu0 0.0
    %128 = vmatpush1.msra.mxu0 0.0
    %129 = vmatprep.subr.mxu0 0.0
    %130 = vmatpush1.msra.mxu0 0.0
    %131 = vmatprep.subr.mxu0 0.0
    %132 = vmatpush1.msra.mxu0 0.0
    %133 = vmatprep.subr.mxu0 0.0
    %134 = vmatpush1.msra.mxu0 0.0
    %135 = vmatprep.subr.mxu0 0.0
    %136 = vmatpush1.msra.mxu0 0.0
    %137 = vmatprep.subr.mxu0 0.0
    %138 = vmatpush1.msra.mxu0 0.0
    %139 = vmatprep.subr.mxu0 0.0
    %140 = vmatpush1.msra.mxu0 0.0
    %141 = vmatprep.subr.mxu0 0.0
    %142 = vmatpush1.msra.mxu0 0.0
    %143 = vmatprep.subr.mxu0 0.0
    %144 = vmatpush1.msra.mxu0 0.0
    %145 = vmatprep.subr.mxu0 0.0
    %146 = vmatpush1.msra.mxu0 0.0
    %147 = vmatprep.subr.mxu0 0.0
    %148 = vmatpush1.msra.mxu0 0.0
    %149 = vmatprep.subr.mxu0 0.0
    %150 = vmatpush1.msra.mxu0 %v110
    %151 = vmatprep.subr.mxu0 0.0
    %152 = vmatpush1.msra.mxu0 %v109
    %153 = vmatprep.subr.mxu0 0.0
    %154 = vmatpush1.msra.mxu0 %v108
    %155 = vmatprep.subr.mxu0 0.0
    %156 = vmatpush1.msra.mxu0 %v107
    %157 = vmatprep.subr.mxu0 0.0
    %158 = vmatpush2.msra.mxu0 0.0
    %159 = vmatprep.subr.mxu0 0.0
    %160 = vmatpush2.msra.mxu0 0.0
    %161 = vmatprep.subr.mxu0 0.0
    %162 = vmatpush2.msra.mxu0 0.0
    %163 = vmatprep.subr.mxu0 0.0
    %164 = vmatpush2.msra.mxu0 0.0
    %165 = vmatprep.subr.mxu0 0.0
    %166 = vmatpush2.msra.mxu0 0.0
    %167 = vmatprep.subr.mxu0 0.0
    %168 = vmatpush2.msra.mxu0 0.0
    %169 = vmatprep.subr.mxu0 0.0
    %170 = vmatpush2.msra.mxu0 0.0
    %171 = vmatprep.subr.mxu0 0.0
    %172 = vmatpush2.msra.mxu0 0.0
    %173 = vmatprep.subr.mxu0 0.0
    %174 = vmatpush2.msra.mxu0 0.0
    %175 = vmatprep.subr.mxu0 0.0
    %176 = vmatpush2.msra.mxu0 0.0
    %177 = vmatprep.subr.mxu0 0.0
    %178 = vmatpush2.msra.mxu0 0.0
    %179 = vmatprep.subr.mxu0 0.0
    %180 = vmatpush2.msra.mxu0 0.0
    %181 = vmatprep.subr.mxu0 0.0
    %182 = vmatpush2.msra.mxu0 0.0
    %183 = vmatprep.subr.mxu0 0.0
    %184 = vmatpush2.msra.mxu0 0.0
    %185 = vmatprep.subr.mxu0 0.0
    %186 = vmatpush2.msra.mxu0 0.0
    %187 = vmatprep.subr.mxu0 0.0
    %188 = vmatpush2.msra.mxu0 0.0
    %189 = vmatprep.mubr.f32.mxu0 0.0
    %190 = vmatmul.mubr.f32.gmra.mxu0 %v120
    %v191 = vpop.f32.mrf.mxu0
    %v192 = vadd.f32 %v116, %v191
    %v193 = vpop.f32.mrf.mxu0
    %194 = vmatprep.mubr.f32.mxu0 0.0
    %195 = vmatmul.mubr.f32.gmra.mxu0 %v123
    %v196 = vpop.f32.mrf.mxu0
    %v197 = vadd.f32 %v116, %v196
    %v198 = vpop.f32.mrf.mxu0
    %199 = vdwg.mxu0
    %v200 = vld [vmem:[%s3] sm:$0xff]
    %v201 = vld [vmem:[%s3 + $0x8] sm:$0xff]
    %v202 = vld [vmem:[%s3 + $0x10] sm:$0xff]
    %v203 = vld [vmem:[%s3 + $0x18] sm:$0xff]
    %v204 = vlaneseq
    %v205 = vand.u32 %v204, 127
    %vm206 = vcmp.ge.s32.totalorder %v205, 64
    %vm207 = vcmp.lt.s32.totalorder %v205, 96
    %vm208 = vmand %vm206, %vm207
    %v210 = vsel %vm118, 0.0, 0
    %212 = vmatprep.subr.mxu0 0.0
    %213 = vmatpush1.msra.mxu0 0.0
    %214 = vmatprep.subr.mxu0 0.0
    %215 = vmatpush1.msra.mxu0 0.0
    %216 = vmatprep.subr.mxu0 0.0
    %217 = vmatpush1.msra.mxu0 0.0
    %218 = vmatprep.subr.mxu0 0.0
    %219 = vmatpush1.msra.mxu0 0.0
    %220 = vmatprep.subr.mxu0 0.0
    %221 = vmatpush1.msra.mxu0 0.0
    %222 = vmatprep.subr.mxu0 0.0
    %223 = vmatpush1.msra.mxu0 0.0
    %224 = vmatprep.subr.mxu0 0.0
    %225 = vmatpush1.msra.mxu0 0.0
    %226 = vmatprep.subr.mxu0 0.0
    %227 = vmatpush1.msra.mxu0 0.0
    %228 = vmatprep.subr.mxu0 0.0
    %229 = vmatpush1.msra.mxu0 0.0
    %230 = vmatprep.subr.mxu0 0.0
    %231 = vmatpush1.msra.mxu0 0.0
    %232 = vmatprep.subr.mxu0 0.0
    %233 = vmatpush1.msra.mxu0 0.0
    %234 = vmatprep.subr.mxu0 0.0
    %235 = vmatpush1.msra.mxu0 0.0
    %236 = vmatprep.subr.mxu0 0.0
    %237 = vmatpush1.msra.mxu0 %v203
    %238 = vmatprep.subr.mxu0 0.0
    %239 = vmatpush1.msra.mxu0 %v202
    %240 = vmatprep.subr.mxu0 0.0
    %241 = vmatpush1.msra.mxu0 %v201
    %242 = vmatprep.subr.mxu0 0.0
    %243 = vmatpush1.msra.mxu0 %v200
    %244 = vmatprep.subr.mxu0 0.0
    %245 = vmatpush2.msra.mxu0 0.0
    %246 = vmatprep.subr.mxu0 0.0
    %247 = vmatpush2.msra.mxu0 0.0
    %248 = vmatprep.subr.mxu0 0.0
    %249 = vmatpush2.msra.mxu0 0.0
    %250 = vmatprep.subr.mxu0 0.0
    %251 = vmatpush2.msra.mxu0 0.0
    %252 = vmatprep.subr.mxu0 0.0
    %253 = vmatpush2.msra.mxu0 0.0
    %254 = vmatprep.subr.mxu0 0.0
    %255 = vmatpush2.msra.mxu0 0.0
    %256 = vmatprep.subr.mxu0 0.0
    %257 = vmatpush2.msra.mxu0 0.0
    %258 = vmatprep.subr.mxu0 0.0
    %259 = vmatpush2.msra.mxu0 0.0
    %260 = vmatprep.subr.mxu0 0.0
    %261 = vmatpush2.msra.mxu0 0.0
    %262 = vmatprep.subr.mxu0 0.0
    %263 = vmatpush2.msra.mxu0 0.0
    %264 = vmatprep.subr.mxu0 0.0
    %265 = vmatpush2.msra.mxu0 0.0
    %266 = vmatprep.subr.mxu0 0.0
    %267 = vmatpush2.msra.mxu0 0.0
    %268 = vmatprep.subr.mxu0 0.0
    %269 = vmatpush2.msra.mxu0 0.0
    %270 = vmatprep.subr.mxu0 0.0
    %271 = vmatpush2.msra.mxu0 0.0
    %272 = vmatprep.subr.mxu0 0.0
    %273 = vmatpush2.msra.mxu0 0.0
    %274 = vmatprep.subr.mxu0 0.0
    %275 = vmatpush2.msra.mxu0 0.0
    %276 = vmatprep.mubr.f32.mxu0 0.0
    %277 = vmatmul.mubr.f32.gmra.mxu0 %v210
    %v278 = vpop.f32.mrf.mxu0
    %v279 = vadd.f32 0.0, %v278
    %v280 = vpop.f32.mrf.mxu0
    %281 = vdwg.mxu0
    %v282 = vadd.f32 %v192, %v279
    %v283 = vtanh.pop %v282
    %v284 = vxor.u32 %v282, 2147483648
    %v285 = vmul.f32 %v284, 1.442695
    %v286 = vpow.pop %v285
    %v287 = vadd.f32 %v286, 1.0
    %v288 = vrcp.pop %v287
    %v289 = vmul.f32 1.0, %v288
    %v290 = vsel %vm208, %v283, %v289
    %v291 = vmul.f32 %v290, 0.0
    %293 = vrot.lane.b32.xlu0 %v290, 64
    %v294 = vpop.permute.xlu0 %293
    %v296 = vmul.f32 %v290, %v294
    %298 = vrot.lane.b32.xlu0 %v296, 32
    %v299 = vpop.permute.xlu0 %298
    %v301 = vadd.f32 %v291, %v299
    %v302 = vtanh.pop %v301
    %304 = vrot.lane.b32.xlu0 %v302, 64
    %v305 = vpop.permute.xlu0 %304
    %v307 = vmul.f32 %v290, %v305
    %309 = vrot.lane.b32.xlu0 %v307, 32
    %v310 = vpop.permute.xlu0 %309
    %v311 = vsel %vm118, %v310, 0
    %313 = vmatprep.subr.mxu0 0.0
    %314 = vmatpush1.msra.mxu0 0.0
    %315 = vmatprep.subr.mxu0 0.0
    %316 = vmatpush1.msra.mxu0 0.0
    %317 = vmatprep.subr.mxu0 0.0
    %318 = vmatpush1.msra.mxu0 0.0
    %319 = vmatprep.subr.mxu0 0.0
    %320 = vmatpush1.msra.mxu0 0.0
    %321 = vmatprep.subr.mxu0 0.0
    %322 = vmatpush1.msra.mxu0 0.0
    %323 = vmatprep.subr.mxu0 0.0
    %324 = vmatpush1.msra.mxu0 0.0
    %325 = vmatprep.subr.mxu0 0.0
    %326 = vmatpush1.msra.mxu0 0.0
    %327 = vmatprep.subr.mxu0 0.0
    %328 = vmatpush1.msra.mxu0 0.0
    %329 = vmatprep.subr.mxu0 0.0
    %330 = vmatpush1.msra.mxu0 0.0
    %331 = vmatprep.subr.mxu0 0.0
    %332 = vmatpush1.msra.mxu0 0.0
    %333 = vmatprep.subr.mxu0 0.0
    %334 = vmatpush1.msra.mxu0 0.0
    %335 = vmatprep.subr.mxu0 0.0
    %336 = vmatpush1.msra.mxu0 0.0
    %337 = vmatprep.subr.mxu0 0.0
    %338 = vmatpush1.msra.mxu0 %v203
    %339 = vmatprep.subr.mxu0 0.0
    %340 = vmatpush1.msra.mxu0 %v202
    %341 = vmatprep.subr.mxu0 0.0
    %342 = vmatpush1.msra.mxu0 %v201
    %343 = vmatprep.subr.mxu0 0.0
    %344 = vmatpush1.msra.mxu0 %v200
    %345 = vmatprep.subr.mxu0 0.0
    %346 = vmatpush2.msra.mxu0 0.0
    %347 = vmatprep.subr.mxu0 0.0
    %348 = vmatpush2.msra.mxu0 0.0
    %349 = vmatprep.subr.mxu0 0.0
    %350 = vmatpush2.msra.mxu0 0.0
    %351 = vmatprep.subr.mxu0 0.0
    %352 = vmatpush2.msra.mxu0 0.0
    %353 = vmatprep.subr.mxu0 0.0
    %354 = vmatpush2.msra.mxu0 0.0
    %355 = vmatprep.subr.mxu0 0.0
    %356 = vmatpush2.msra.mxu0 0.0
    %357 = vmatprep.subr.mxu0 0.0
    %358 = vmatpush2.msra.mxu0 0.0
    %359 = vmatprep.subr.mxu0 0.0
    %360 = vmatpush2.msra.mxu0 0.0
    %361 = vmatprep.subr.mxu0 0.0
    %362 = vmatpush2.msra.mxu0 0.0
    %363 = vmatprep.subr.mxu0 0.0
    %364 = vmatpush2.msra.mxu0 0.0
    %365 = vmatprep.subr.mxu0 0.0
    %366 = vmatpush2.msra.mxu0 0.0
    %367 = vmatprep.subr.mxu0 0.0
    %368 = vmatpush2.msra.mxu0 0.0
    %369 = vmatprep.subr.mxu0 0.0
    %370 = vmatpush2.msra.mxu0 0.0
    %371 = vmatprep.subr.mxu0 0.0
    %372 = vmatpush2.msra.mxu0 0.0
    %373 = vmatprep.subr.mxu0 0.0
    %374 = vmatpush2.msra.mxu0 0.0
    %375 = vmatprep.subr.mxu0 0.0
    %376 = vmatpush2.msra.mxu0 0.0
    %377 = vmatprep.mubr.f32.mxu0 0.0
    %378 = vmatmul.mubr.f32.gmra.mxu0 %v311
    %v379 = vpop.f32.mrf.mxu0
    %v380 = vadd.f32 0.0, %v379
    %v381 = vpop.f32.mrf.mxu0
    %382 = vdwg.mxu0
    %v384 = vrot.slane %v380, 6
    %v386 = vadd.f32 %v192, %v384
    %v387 = vtanh.pop %v386
    %v388 = vxor.u32 %v386, 2147483648
    %v389 = vmul.f32 %v388, 1.442695
    %v390 = vpow.pop %v389
    %v391 = vadd.f32 %v390, 1.0
    %v392 = vrcp.pop %v391
    %v393 = vmul.f32 1.0, %v392
    %v394 = vsel %vm208, %v387, %v393
    %v396 = vrot.slane %v301, 6
    %v398 = vmul.f32 %v394, %v396
    %400 = vrot.lane.b32.xlu0 %v394, 64
    %v401 = vpop.permute.xlu0 %400
    %v403 = vmul.f32 %v394, %v401
    %405 = vrot.lane.b32.xlu0 %v403, 32
    %v406 = vpop.permute.xlu0 %405
    %v408 = vadd.f32 %v398, %v406
    %v409 = vtanh.pop %v408
    %411 = vrot.lane.b32.xlu0 %v409, 64
    %v412 = vpop.permute.xlu0 %411
    %v414 = vmul.f32 %v394, %v412
    %v416 = vrot.slane %v414, 2
    %417 = vrot.lane.b32.xlu0 %v416, 32
    %v418 = vpop.permute.xlu0 %417
    %v419 = vsel %vm118, %v418, 0
    %421 = vmatprep.subr.mxu0 0.0
    %422 = vmatpush1.msra.mxu0 0.0
    %423 = vmatprep.subr.mxu0 0.0
    %424 = vmatpush1.msra.mxu0 0.0
    %425 = vmatprep.subr.mxu0 0.0
    %426 = vmatpush1.msra.mxu0 0.0
    %427 = vmatprep.subr.mxu0 0.0
    %428 = vmatpush1.msra.mxu0 0.0
    %429 = vmatprep.subr.mxu0 0.0
    %430 = vmatpush1.msra.mxu0 0.0
    %431 = vmatprep.subr.mxu0 0.0
    %432 = vmatpush1.msra.mxu0 0.0
    %433 = vmatprep.subr.mxu0 0.0
    %434 = vmatpush1.msra.mxu0 0.0
    %435 = vmatprep.subr.mxu0 0.0
    %436 = vmatpush1.msra.mxu0 0.0
    %437 = vmatprep.subr.mxu0 0.0
    %438 = vmatpush1.msra.mxu0 0.0
    %439 = vmatprep.subr.mxu0 0.0
    %440 = vmatpush1.msra.mxu0 0.0
    %441 = vmatprep.subr.mxu0 0.0
    %442 = vmatpush1.msra.mxu0 0.0
    %443 = vmatprep.subr.mxu0 0.0
    %444 = vmatpush1.msra.mxu0 0.0
    %445 = vmatprep.subr.mxu0 0.0
    %446 = vmatpush1.msra.mxu0 %v203
    %447 = vmatprep.subr.mxu0 0.0
    %448 = vmatpush1.msra.mxu0 %v202
    %449 = vmatprep.subr.mxu0 0.0
    %450 = vmatpush1.msra.mxu0 %v201
    %451 = vmatprep.subr.mxu0 0.0
    %452 = vmatpush1.msra.mxu0 %v200
    %453 = vmatprep.subr.mxu0 0.0
    %454 = vmatpush2.msra.mxu0 0.0
    %455 = vmatprep.subr.mxu0 0.0
    %456 = vmatpush2.msra.mxu0 0.0
    %457 = vmatprep.subr.mxu0 0.0
    %458 = vmatpush2.msra.mxu0 0.0
    %459 = vmatprep.subr.mxu0 0.0
    %460 = vmatpush2.msra.mxu0 0.0
    %461 = vmatprep.subr.mxu0 0.0
    %462 = vmatpush2.msra.mxu0 0.0
    %463 = vmatprep.subr.mxu0 0.0
    %464 = vmatpush2.msra.mxu0 0.0
    %465 = vmatprep.subr.mxu0 0.0
    %466 = vmatpush2.msra.mxu0 0.0
    %467 = vmatprep.subr.mxu0 0.0
    %468 = vmatpush2.msra.mxu0 0.0
    %469 = vmatprep.subr.mxu0 0.0
    %470 = vmatpush2.msra.mxu0 0.0
    %471 = vmatprep.subr.mxu0 0.0
    %472 = vmatpush2.msra.mxu0 0.0
    %473 = vmatprep.subr.mxu0 0.0
    %474 = vmatpush2.msra.mxu0 0.0
    %475 = vmatprep.subr.mxu0 0.0
    %476 = vmatpush2.msra.mxu0 0.0
    %477 = vmatprep.subr.mxu0 0.0
    %478 = vmatpush2.msra.mxu0 0.0
    %479 = vmatprep.subr.mxu0 0.0
    %480 = vmatpush2.msra.mxu0 0.0
    %481 = vmatprep.subr.mxu0 0.0
    %482 = vmatpush2.msra.mxu0 0.0
    %483 = vmatprep.subr.mxu0 0.0
    %484 = vmatpush2.msra.mxu0 0.0
    %485 = vmatprep.mubr.f32.mxu0 0.0
    %486 = vmatmul.mubr.f32.gmra.mxu0 %v419
    %v487 = vpop.f32.mrf.mxu0
    %v488 = vadd.f32 0.0, %v487
    %v489 = vpop.f32.mrf.mxu0
    %490 = vdwg.mxu0
    %v492 = vrot.slane %v488, 4
    %v494 = vadd.f32 %v192, %v492
    %v495 = vtanh.pop %v494
    %v496 = vxor.u32 %v494, 2147483648
    %v497 = vmul.f32 %v496, 1.442695
    %v498 = vpow.pop %v497
    %v499 = vadd.f32 %v498, 1.0
    %v500 = vrcp.pop %v499
    %v501 = vmul.f32 1.0, %v500
    %v502 = vsel %vm208, %v495, %v501
    %v504 = vrot.slane %v408, 6
    %v506 = vmul.f32 %v502, %v504
    %508 = vrot.lane.b32.xlu0 %v502, 64
    %v509 = vpop.permute.xlu0 %508
    %v511 = vmul.f32 %v502, %v509
    %513 = vrot.lane.b32.xlu0 %v511, 32
    %v514 = vpop.permute.xlu0 %513
    %v516 = vadd.f32 %v506, %v514
    %v517 = vtanh.pop %v516
    %519 = vrot.lane.b32.xlu0 %v517, 64
    %v520 = vpop.permute.xlu0 %519
    %v522 = vmul.f32 %v502, %v520
    %v524 = vrot.slane %v522, 4
    %525 = vrot.lane.b32.xlu0 %v524, 32
    %v526 = vpop.permute.xlu0 %525
    %v527 = vsel %vm118, %v526, 0
    %529 = vmatprep.subr.mxu0 0.0
    %530 = vmatpush1.msra.mxu0 0.0
    %531 = vmatprep.subr.mxu0 0.0
    %532 = vmatpush1.msra.mxu0 0.0
    %533 = vmatprep.subr.mxu0 0.0
    %534 = vmatpush1.msra.mxu0 0.0
    %535 = vmatprep.subr.mxu0 0.0
    %536 = vmatpush1.msra.mxu0 0.0
    %537 = vmatprep.subr.mxu0 0.0
    %538 = vmatpush1.msra.mxu0 0.0
    %539 = vmatprep.subr.mxu0 0.0
    %540 = vmatpush1.msra.mxu0 0.0
    %541 = vmatprep.subr.mxu0 0.0
    %542 = vmatpush1.msra.mxu0 0.0
    %543 = vmatprep.subr.mxu0 0.0
    %544 = vmatpush1.msra.mxu0 0.0
    %545 = vmatprep.subr.mxu0 0.0
    %546 = vmatpush1.msra.mxu0 0.0
    %547 = vmatprep.subr.mxu0 0.0
    %548 = vmatpush1.msra.mxu0 0.0
    %549 = vmatprep.subr.mxu0 0.0
    %550 = vmatpush1.msra.mxu0 0.0
    %551 = vmatprep.subr.mxu0 0.0
    %552 = vmatpush1.msra.mxu0 0.0
    %553 = vmatprep.subr.mxu0 0.0
    %554 = vmatpush1.msra.mxu0 %v203
    %555 = vmatprep.subr.mxu0 0.0
    %556 = vmatpush1.msra.mxu0 %v202
    %557 = vmatprep.subr.mxu0 0.0
    %558 = vmatpush1.msra.mxu0 %v201
    %559 = vmatprep.subr.mxu0 0.0
    %560 = vmatpush1.msra.mxu0 %v200
    %561 = vmatprep.subr.mxu0 0.0
    %562 = vmatpush2.msra.mxu0 0.0
    %563 = vmatprep.subr.mxu0 0.0
    %564 = vmatpush2.msra.mxu0 0.0
    %565 = vmatprep.subr.mxu0 0.0
    %566 = vmatpush2.msra.mxu0 0.0
    %567 = vmatprep.subr.mxu0 0.0
    %568 = vmatpush2.msra.mxu0 0.0
    %569 = vmatprep.subr.mxu0 0.0
    %570 = vmatpush2.msra.mxu0 0.0
    %571 = vmatprep.subr.mxu0 0.0
    %572 = vmatpush2.msra.mxu0 0.0
    %573 = vmatprep.subr.mxu0 0.0
    %574 = vmatpush2.msra.mxu0 0.0
    %575 = vmatprep.subr.mxu0 0.0
    %576 = vmatpush2.msra.mxu0 0.0
    %577 = vmatprep.subr.mxu0 0.0
    %578 = vmatpush2.msra.mxu0 0.0
    %579 = vmatprep.subr.mxu0 0.0
    %580 = vmatpush2.msra.mxu0 0.0
    %581 = vmatprep.subr.mxu0 0.0
    %582 = vmatpush2.msra.mxu0 0.0
    %583 = vmatprep.subr.mxu0 0.0
    %584 = vmatpush2.msra.mxu0 0.0
    %585 = vmatprep.subr.mxu0 0.0
    %586 = vmatpush2.msra.mxu0 0.0
    %587 = vmatprep.subr.mxu0 0.0
    %588 = vmatpush2.msra.mxu0 0.0
    %589 = vmatprep.subr.mxu0 0.0
    %590 = vmatpush2.msra.mxu0 0.0
    %591 = vmatprep.subr.mxu0 0.0
    %592 = vmatpush2.msra.mxu0 0.0
    %593 = vmatprep.mubr.f32.mxu0 0.0
    %594 = vmatmul.mubr.f32.gmra.mxu0 %v527
    %v595 = vpop.f32.mrf.mxu0
    %v596 = vadd.f32 0.0, %v595
    %v597 = vpop.f32.mrf.mxu0
    %598 = vdwg.mxu0
    %v600 = vrot.slane %v596, 2
    %v602 = vadd.f32 %v192, %v600
    %v603 = vtanh.pop %v602
    %v604 = vxor.u32 %v602, 2147483648
    %v605 = vmul.f32 %v604, 1.442695
    %v606 = vpow.pop %v605
    %v607 = vadd.f32 %v606, 1.0
    %v608 = vrcp.pop %v607
    %v609 = vmul.f32 1.0, %v608
    %v610 = vsel %vm208, %v603, %v609
    %v612 = vrot.slane %v516, 6
    %v614 = vmul.f32 %v610, %v612
    %616 = vrot.lane.b32.xlu0 %v610, 64
    %v617 = vpop.permute.xlu0 %616
    %v619 = vmul.f32 %v610, %v617
    %621 = vrot.lane.b32.xlu0 %v619, 32
    %v622 = vpop.permute.xlu0 %621
    %v624 = vadd.f32 %v614, %v622
    %v625 = vtanh.pop %v624
    %627 = vrot.lane.b32.xlu0 %v625, 64
    %v628 = vpop.permute.xlu0 %627
    %v630 = vmul.f32 %v610, %v628
    %v632 = vrot.slane %v630, 6
    %633 = vrot.lane.b32.xlu0 %v632, 32
    %v634 = vpop.permute.xlu0 %633
    %v635 = vsel %vm118, %v634, 0
    %637 = vmatprep.subr.mxu0 0.0
    %638 = vmatpush1.msra.mxu0 0.0
    %639 = vmatprep.subr.mxu0 0.0
    %640 = vmatpush1.msra.mxu0 0.0
    %641 = vmatprep.subr.mxu0 0.0
    %642 = vmatpush1.msra.mxu0 0.0
    %643 = vmatprep.subr.mxu0 0.0
    %644 = vmatpush1.msra.mxu0 0.0
    %645 = vmatprep.subr.mxu0 0.0
    %646 = vmatpush1.msra.mxu0 0.0
    %647 = vmatprep.subr.mxu0 0.0
    %648 = vmatpush1.msra.mxu0 0.0
    %649 = vmatprep.subr.mxu0 0.0
    %650 = vmatpush1.msra.mxu0 0.0
    %651 = vmatprep.subr.mxu0 0.0
    %652 = vmatpush1.msra.mxu0 0.0
    %653 = vmatprep.subr.mxu0 0.0
    %654 = vmatpush1.msra.mxu0 0.0
    %655 = vmatprep.subr.mxu0 0.0
    %656 = vmatpush1.msra.mxu0 0.0
    %657 = vmatprep.subr.mxu0 0.0
    %658 = vmatpush1.msra.mxu0 0.0
    %659 = vmatprep.subr.mxu0 0.0
    %660 = vmatpush1.msra.mxu0 0.0
    %661 = vmatprep.subr.mxu0 0.0
    %662 = vmatpush1.msra.mxu0 %v203
    %663 = vmatprep.subr.mxu0 0.0
    %664 = vmatpush1.msra.mxu0 %v202
    %665 = vmatprep.subr.mxu0 0.0
    %666 = vmatpush1.msra.mxu0 %v201
    %667 = vmatprep.subr.mxu0 0.0
    %668 = vmatpush1.msra.mxu0 %v200
    %669 = vmatprep.subr.mxu0 0.0
    %670 = vmatpush2.msra.mxu0 0.0
    %671 = vmatprep.subr.mxu0 0.0
    %672 = vmatpush2.msra.mxu0 0.0
    %673 = vmatprep.subr.mxu0 0.0
    %674 = vmatpush2.msra.mxu0 0.0
    %675 = vmatprep.subr.mxu0 0.0
    %676 = vmatpush2.msra.mxu0 0.0
    %677 = vmatprep.subr.mxu0 0.0
    %678 = vmatpush2.msra.mxu0 0.0
    %679 = vmatprep.subr.mxu0 0.0
    %680 = vmatpush2.msra.mxu0 0.0
    %681 = vmatprep.subr.mxu0 0.0
    %682 = vmatpush2.msra.mxu0 0.0
    %683 = vmatprep.subr.mxu0 0.0
    %684 = vmatpush2.msra.mxu0 0.0
    %685 = vmatprep.subr.mxu0 0.0
    %686 = vmatpush2.msra.mxu0 0.0
    %687 = vmatprep.subr.mxu0 0.0
    %688 = vmatpush2.msra.mxu0 0.0
    %689 = vmatprep.subr.mxu0 0.0
    %690 = vmatpush2.msra.mxu0 0.0
    %691 = vmatprep.subr.mxu0 0.0
    %692 = vmatpush2.msra.mxu0 0.0
    %693 = vmatprep.subr.mxu0 0.0
    %694 = vmatpush2.msra.mxu0 0.0
    %695 = vmatprep.subr.mxu0 0.0
    %696 = vmatpush2.msra.mxu0 0.0
    %697 = vmatprep.subr.mxu0 0.0
    %698 = vmatpush2.msra.mxu0 0.0
    %699 = vmatprep.subr.mxu0 0.0
    %700 = vmatpush2.msra.mxu0 0.0
    %701 = vmatprep.mubr.f32.mxu0 0.0
    %702 = vmatmul.mubr.f32.gmra.mxu0 %v635
    %v703 = vpop.f32.mrf.mxu0
    %v704 = vadd.f32 0.0, %v703
    %v705 = vpop.f32.mrf.mxu0
    %706 = vdwg.mxu0
    %v707 = vadd.f32 %v197, %v704
    %v708 = vtanh.pop %v707
    %v709 = vxor.u32 %v707, 2147483648
    %v710 = vmul.f32 %v709, 1.442695
    %v711 = vpow.pop %v710
    %v712 = vadd.f32 %v711, 1.0
    %v713 = vrcp.pop %v712
    %v714 = vmul.f32 1.0, %v713
    %v715 = vsel %vm208, %v708, %v714
    %v717 = vrot.slane %v624, 6
    %v719 = vmul.f32 %v715, %v717
    %721 = vrot.lane.b32.xlu0 %v715, 64
    %v722 = vpop.permute.xlu0 %721
    %v724 = vmul.f32 %v715, %v722
    %726 = vrot.lane.b32.xlu0 %v724, 32
    %v727 = vpop.permute.xlu0 %726
    %v729 = vadd.f32 %v719, %v727
    %v730 = vtanh.pop %v729
    %732 = vrot.lane.b32.xlu0 %v730, 64
    %v733 = vpop.permute.xlu0 %732
    %v735 = vmul.f32 %v715, %v733
    %737 = vrot.lane.b32.xlu0 %v735, 32
    %v738 = vpop.permute.xlu0 %737
    %v739 = vsel %vm118, %v738, 0
    %741 = vmatprep.subr.mxu0 0.0
    %742 = vmatpush1.msra.mxu0 0.0
    %743 = vmatprep.subr.mxu0 0.0
    %744 = vmatpush1.msra.mxu0 0.0
    %745 = vmatprep.subr.mxu0 0.0
    %746 = vmatpush1.msra.mxu0 0.0
    %747 = vmatprep.subr.mxu0 0.0
    %748 = vmatpush1.msra.mxu0 0.0
    %749 = vmatprep.subr.mxu0 0.0
    %750 = vmatpush1.msra.mxu0 0.0
    %751 = vmatprep.subr.mxu0 0.0
    %752 = vmatpush1.msra.mxu0 0.0
    %753 = vmatprep.subr.mxu0 0.0
    %754 = vmatpush1.msra.mxu0 0.0
    %755 = vmatprep.subr.mxu0 0.0
    %756 = vmatpush1.msra.mxu0 0.0
    %757 = vmatprep.subr.mxu0 0.0
    %758 = vmatpush1.msra.mxu0 0.0
    %759 = vmatprep.subr.mxu0 0.0
    %760 = vmatpush1.msra.mxu0 0.0
    %761 = vmatprep.subr.mxu0 0.0
    %762 = vmatpush1.msra.mxu0 0.0
    %763 = vmatprep.subr.mxu0 0.0
    %764 = vmatpush1.msra.mxu0 0.0
    %765 = vmatprep.subr.mxu0 0.0
    %766 = vmatpush1.msra.mxu0 %v203
    %767 = vmatprep.subr.mxu0 0.0
    %768 = vmatpush1.msra.mxu0 %v202
    %769 = vmatprep.subr.mxu0 0.0
    %770 = vmatpush1.msra.mxu0 %v201
    %771 = vmatprep.subr.mxu0 0.0
    %772 = vmatpush1.msra.mxu0 %v200
    %773 = vmatprep.subr.mxu0 0.0
    %774 = vmatpush2.msra.mxu0 0.0
    %775 = vmatprep.subr.mxu0 0.0
    %776 = vmatpush2.msra.mxu0 0.0
    %777 = vmatprep.subr.mxu0 0.0
    %778 = vmatpush2.msra.mxu0 0.0
    %779 = vmatprep.subr.mxu0 0.0
    %780 = vmatpush2.msra.mxu0 0.0
    %781 = vmatprep.subr.mxu0 0.0
    %782 = vmatpush2.msra.mxu0 0.0
    %783 = vmatprep.subr.mxu0 0.0
    %784 = vmatpush2.msra.mxu0 0.0
    %785 = vmatprep.subr.mxu0 0.0
    %786 = vmatpush2.msra.mxu0 0.0
    %787 = vmatprep.subr.mxu0 0.0
    %788 = vmatpush2.msra.mxu0 0.0
    %789 = vmatprep.subr.mxu0 0.0
    %790 = vmatpush2.msra.mxu0 0.0
    %791 = vmatprep.subr.mxu0 0.0
    %792 = vmatpush2.msra.mxu0 0.0
    %793 = vmatprep.subr.mxu0 0.0
    %794 = vmatpush2.msra.mxu0 0.0
    %795 = vmatprep.subr.mxu0 0.0
    %796 = vmatpush2.msra.mxu0 0.0
    %797 = vmatprep.subr.mxu0 0.0
    %798 = vmatpush2.msra.mxu0 0.0
    %799 = vmatprep.subr.mxu0 0.0
    %800 = vmatpush2.msra.mxu0 0.0
    %801 = vmatprep.subr.mxu0 0.0
    %802 = vmatpush2.msra.mxu0 0.0
    %803 = vmatprep.subr.mxu0 0.0
    %804 = vmatpush2.msra.mxu0 0.0
    %805 = vmatprep.mubr.f32.mxu0 0.0
    %806 = vmatmul.mubr.f32.gmra.mxu0 %v739
    %v807 = vpop.f32.mrf.mxu0
    %v808 = vadd.f32 0.0, %v807
    %v809 = vpop.f32.mrf.mxu0
    %810 = vdwg.mxu0
    %v812 = vrot.slane %v808, 6
    %v814 = vadd.f32 %v197, %v812
    %v815 = vtanh.pop %v814
    %v816 = vxor.u32 %v814, 2147483648
    %v817 = vmul.f32 %v816, 1.442695
    %v818 = vpow.pop %v817
    %v819 = vadd.f32 %v818, 1.0
    %v820 = vrcp.pop %v819
    %v821 = vmul.f32 1.0, %v820
    %v822 = vsel %vm208, %v815, %v821
    %v824 = vrot.slane %v729, 6
    %v826 = vmul.f32 %v822, %v824
    %828 = vrot.lane.b32.xlu0 %v822, 64
    %v829 = vpop.permute.xlu0 %828
    %v831 = vmul.f32 %v822, %v829
    %833 = vrot.lane.b32.xlu0 %v831, 32
    %v834 = vpop.permute.xlu0 %833
    %v836 = vadd.f32 %v826, %v834
    %v837 = vtanh.pop %v836
    %839 = vrot.lane.b32.xlu0 %v837, 64
    %v840 = vpop.permute.xlu0 %839
    %v842 = vmul.f32 %v822, %v840
    %v844 = vrot.slane %v842, 2
    %845 = vrot.lane.b32.xlu0 %v844, 32
    %v846 = vpop.permute.xlu0 %845
    %v847 = vsel %vm118, %v846, 0
    %849 = vmatprep.subr.mxu0 0.0
    %850 = vmatpush1.msra.mxu0 0.0
    %851 = vmatprep.subr.mxu0 0.0
    %852 = vmatpush1.msra.mxu0 0.0
    %853 = vmatprep.subr.mxu0 0.0
    %854 = vmatpush1.msra.mxu0 0.0
    %855 = vmatprep.subr.mxu0 0.0
    %856 = vmatpush1.msra.mxu0 0.0
    %857 = vmatprep.subr.mxu0 0.0
    %858 = vmatpush1.msra.mxu0 0.0
    %859 = vmatprep.subr.mxu0 0.0
    %860 = vmatpush1.msra.mxu0 0.0
    %861 = vmatprep.subr.mxu0 0.0
    %862 = vmatpush1.msra.mxu0 0.0
    %863 = vmatprep.subr.mxu0 0.0
    %864 = vmatpush1.msra.mxu0 0.0
    %865 = vmatprep.subr.mxu0 0.0
    %866 = vmatpush1.msra.mxu0 0.0
    %867 = vmatprep.subr.mxu0 0.0
    %868 = vmatpush1.msra.mxu0 0.0
    %869 = vmatprep.subr.mxu0 0.0
    %870 = vmatpush1.msra.mxu0 0.0
    %871 = vmatprep.subr.mxu0 0.0
    %872 = vmatpush1.msra.mxu0 0.0
    %873 = vmatprep.subr.mxu0 0.0
    %874 = vmatpush1.msra.mxu0 %v203
    %875 = vmatprep.subr.mxu0 0.0
    %876 = vmatpush1.msra.mxu0 %v202
    %877 = vmatprep.subr.mxu0 0.0
    %878 = vmatpush1.msra.mxu0 %v201
    %879 = vmatprep.subr.mxu0 0.0
    %880 = vmatpush1.msra.mxu0 %v200
    %881 = vmatprep.subr.mxu0 0.0
    %882 = vmatpush2.msra.mxu0 0.0
    %883 = vmatprep.subr.mxu0 0.0
    %884 = vmatpush2.msra.mxu0 0.0
    %885 = vmatprep.subr.mxu0 0.0
    %886 = vmatpush2.msra.mxu0 0.0
    %887 = vmatprep.subr.mxu0 0.0
    %888 = vmatpush2.msra.mxu0 0.0
    %889 = vmatprep.subr.mxu0 0.0
    %890 = vmatpush2.msra.mxu0 0.0
    %891 = vmatprep.subr.mxu0 0.0
    %892 = vmatpush2.msra.mxu0 0.0
    %893 = vmatprep.subr.mxu0 0.0
    %894 = vmatpush2.msra.mxu0 0.0
    %895 = vmatprep.subr.mxu0 0.0
    %896 = vmatpush2.msra.mxu0 0.0
    %897 = vmatprep.subr.mxu0 0.0
    %898 = vmatpush2.msra.mxu0 0.0
    %899 = vmatprep.subr.mxu0 0.0
    %900 = vmatpush2.msra.mxu0 0.0
    %901 = vmatprep.subr.mxu0 0.0
    %902 = vmatpush2.msra.mxu0 0.0
    %903 = vmatprep.subr.mxu0 0.0
    %904 = vmatpush2.msra.mxu0 0.0
    %905 = vmatprep.subr.mxu0 0.0
    %906 = vmatpush2.msra.mxu0 0.0
    %907 = vmatprep.subr.mxu0 0.0
    %908 = vmatpush2.msra.mxu0 0.0
    %909 = vmatprep.subr.mxu0 0.0
    %910 = vmatpush2.msra.mxu0 0.0
    %911 = vmatprep.subr.mxu0 0.0
    %912 = vmatpush2.msra.mxu0 0.0
    %913 = vmatprep.mubr.f32.mxu0 0.0
    %914 = vmatmul.mubr.f32.gmra.mxu0 %v847
    %v915 = vpop.f32.mrf.mxu0
    %v916 = vadd.f32 0.0, %v915
    %v917 = vpop.f32.mrf.mxu0
    %918 = vdwg.mxu0
    %v920 = vrot.slane %v916, 4
    %v922 = vadd.f32 %v197, %v920
    %v923 = vtanh.pop %v922
    %v924 = vxor.u32 %v922, 2147483648
    %v925 = vmul.f32 %v924, 1.442695
    %v926 = vpow.pop %v925
    %v927 = vadd.f32 %v926, 1.0
    %v928 = vrcp.pop %v927
    %v929 = vmul.f32 1.0, %v928
    %v930 = vsel %vm208, %v923, %v929
    %v932 = vrot.slane %v836, 6
    %v934 = vmul.f32 %v930, %v932
    %936 = vrot.lane.b32.xlu0 %v930, 64
    %v937 = vpop.permute.xlu0 %936
    %v939 = vmul.f32 %v930, %v937
    %941 = vrot.lane.b32.xlu0 %v939, 32
    %v942 = vpop.permute.xlu0 %941
    %v944 = vadd.f32 %v934, %v942
    %v945 = vtanh.pop %v944
    %947 = vrot.lane.b32.xlu0 %v945, 64
    %v948 = vpop.permute.xlu0 %947
    %v950 = vmul.f32 %v930, %v948
    %v952 = vrot.slane %v950, 4
    %953 = vrot.lane.b32.xlu0 %v952, 32
    %v954 = vpop.permute.xlu0 %953
    %v955 = vsel %vm118, %v954, 0
    %957 = vmatprep.subr.mxu0 0.0
    %958 = vmatpush1.msra.mxu0 0.0
    %959 = vmatprep.subr.mxu0 0.0
    %960 = vmatpush1.msra.mxu0 0.0
    %961 = vmatprep.subr.mxu0 0.0
    %962 = vmatpush1.msra.mxu0 0.0
    %963 = vmatprep.subr.mxu0 0.0
    %964 = vmatpush1.msra.mxu0 0.0
    %965 = vmatprep.subr.mxu0 0.0
    %966 = vmatpush1.msra.mxu0 0.0
    %967 = vmatprep.subr.mxu0 0.0
    %968 = vmatpush1.msra.mxu0 0.0
    %969 = vmatprep.subr.mxu0 0.0
    %970 = vmatpush1.msra.mxu0 0.0
    %971 = vmatprep.subr.mxu0 0.0
    %972 = vmatpush1.msra.mxu0 0.0
    %973 = vmatprep.subr.mxu0 0.0
    %974 = vmatpush1.msra.mxu0 0.0
    %975 = vmatprep.subr.mxu0 0.0
    %976 = vmatpush1.msra.mxu0 0.0
    %977 = vmatprep.subr.mxu0 0.0
    %978 = vmatpush1.msra.mxu0 0.0
    %979 = vmatprep.subr.mxu0 0.0
    %980 = vmatpush1.msra.mxu0 0.0
    %981 = vmatprep.subr.mxu0 0.0
    %982 = vmatpush1.msra.mxu0 %v203
    %983 = vmatprep.subr.mxu0 0.0
    %984 = vmatpush1.msra.mxu0 %v202
    %985 = vmatprep.subr.mxu0 0.0
    %986 = vmatpush1.msra.mxu0 %v201
    %987 = vmatprep.subr.mxu0 0.0
    %988 = vmatpush1.msra.mxu0 %v200
    %989 = vmatprep.subr.mxu0 0.0
    %990 = vmatpush2.msra.mxu0 0.0
    %991 = vmatprep.subr.mxu0 0.0
    %992 = vmatpush2.msra.mxu0 0.0
    %993 = vmatprep.subr.mxu0 0.0
    %994 = vmatpush2.msra.mxu0 0.0
    %995 = vmatprep.subr.mxu0 0.0
    %996 = vmatpush2.msra.mxu0 0.0
    %997 = vmatprep.subr.mxu0 0.0
    %998 = vmatpush2.msra.mxu0 0.0
    %999 = vmatprep.subr.mxu0 0.0
    %1000 = vmatpush2.msra.mxu0 0.0
    %1001 = vmatprep.subr.mxu0 0.0
    %1002 = vmatpush2.msra.mxu0 0.0
    %1003 = vmatprep.subr.mxu0 0.0
    %1004 = vmatpush2.msra.mxu0 0.0
    %1005 = vmatprep.subr.mxu0 0.0
    %1006 = vmatpush2.msra.mxu0 0.0
    %1007 = vmatprep.subr.mxu0 0.0
    %1008 = vmatpush2.msra.mxu0 0.0
    %1009 = vmatprep.subr.mxu0 0.0
    %1010 = vmatpush2.msra.mxu0 0.0
    %1011 = vmatprep.subr.mxu0 0.0
    %1012 = vmatpush2.msra.mxu0 0.0
    %1013 = vmatprep.subr.mxu0 0.0
    %1014 = vmatpush2.msra.mxu0 0.0
    %1015 = vmatprep.subr.mxu0 0.0
    %1016 = vmatpush2.msra.mxu0 0.0
    %1017 = vmatprep.subr.mxu0 0.0
    %1018 = vmatpush2.msra.mxu0 0.0
    %1019 = vmatprep.subr.mxu0 0.0
    %1020 = vmatpush2.msra.mxu0 0.0
    %1021 = vmatprep.mubr.f32.mxu0 0.0
    %1022 = vmatmul.mubr.f32.gmra.mxu0 %v955
    %v1023 = vpop.f32.mrf.mxu0
    %v1024 = vadd.f32 0.0, %v1023
    %v1025 = vpop.f32.mrf.mxu0
    %1026 = vdwg.mxu0
    %v1028 = vrot.slane %v1024, 2
    %v1030 = vadd.f32 %v197, %v1028
    %v1031 = vtanh.pop %v1030
    %v1032 = vxor.u32 %v1030, 2147483648
    %v1033 = vmul.f32 %v1032, 1.442695
    %v1034 = vpow.pop %v1033
    %v1035 = vadd.f32 %v1034, 1.0
    %v1036 = vrcp.pop %v1035
    %v1037 = vmul.f32 1.0, %v1036
    %v1038 = vsel %vm208, %v1031, %v1037
    %v1040 = vrot.slane %v944, 6
    %v1042 = vmul.f32 %v1038, %v1040
    %1044 = vrot.lane.b32.xlu0 %v1038, 64
    %v1045 = vpop.permute.xlu0 %1044
    %v1047 = vmul.f32 %v1038, %v1045
    %1049 = vrot.lane.b32.xlu0 %v1047, 32
    %v1050 = vpop.permute.xlu0 %1049
    %v1052 = vadd.f32 %v1042, %v1050
    %v1053 = vtanh.pop %v1052
    %1055 = vrot.lane.b32.xlu0 %v1053, 64
    %v1056 = vpop.permute.xlu0 %1055
    %v1058 = vmul.f32 %v1038, %v1056
    %v1059 = vld [vmem:[%s5] sm:$0xff]
    %v1060 = vld [vmem:[%s5 + $0x8] sm:$0xff]
    %v1061 = vld [vmem:[%s5 + $0x10] sm:$0xff]
    %v1062 = vld [vmem:[%s5 + $0x18] sm:$0xff]
    %v1063 = vld [vmem:[%s6] sm:$0x1]
    %v1065 = vlaneseq
    %v1066 = vshrl.u32 %v1065, 7
    %v1067 = vsub.s32 0, %v1066
    %v1068 = vrot.slane %v1063, %v1067
    %v1071 = vrot.slane %v1058, 6
    %1072 = vrot.lane.b32.xlu0 %v1071, 32
    %v1073 = vpop.permute.xlu0 %1072
    %v1074 = vsel %vm118, %v1073, 0
    %1076 = vmatprep.subr.mxu0 0.0
    %1077 = vmatpush1.msra.mxu0 0.0
    %1078 = vmatprep.subr.mxu0 0.0
    %1079 = vmatpush1.msra.mxu0 0.0
    %1080 = vmatprep.subr.mxu0 0.0
    %1081 = vmatpush1.msra.mxu0 0.0
    %1082 = vmatprep.subr.mxu0 0.0
    %1083 = vmatpush1.msra.mxu0 0.0
    %1084 = vmatprep.subr.mxu0 0.0
    %1085 = vmatpush1.msra.mxu0 0.0
    %1086 = vmatprep.subr.mxu0 0.0
    %1087 = vmatpush1.msra.mxu0 0.0
    %1088 = vmatprep.subr.mxu0 0.0
    %1089 = vmatpush1.msra.mxu0 0.0
    %1090 = vmatprep.subr.mxu0 0.0
    %1091 = vmatpush1.msra.mxu0 0.0
    %1092 = vmatprep.subr.mxu0 0.0
    %1093 = vmatpush1.msra.mxu0 0.0
    %1094 = vmatprep.subr.mxu0 0.0
    %1095 = vmatpush1.msra.mxu0 0.0
    %1096 = vmatprep.subr.mxu0 0.0
    %1097 = vmatpush1.msra.mxu0 0.0
    %1098 = vmatprep.subr.mxu0 0.0
    %1099 = vmatpush1.msra.mxu0 0.0
    %1100 = vmatprep.subr.mxu0 0.0
    %1101 = vmatpush1.msra.mxu0 %v1062
    %1102 = vmatprep.subr.mxu0 0.0
    %1103 = vmatpush1.msra.mxu0 %v1061
    %1104 = vmatprep.subr.mxu0 0.0
    %1105 = vmatpush1.msra.mxu0 %v1060
    %1106 = vmatprep.subr.mxu0 0.0
    %1107 = vmatpush1.msra.mxu0 %v1059
    %1108 = vmatprep.subr.mxu0 0.0
    %1109 = vmatpush2.msra.mxu0 0.0
    %1110 = vmatprep.subr.mxu0 0.0
    %1111 = vmatpush2.msra.mxu0 0.0
    %1112 = vmatprep.subr.mxu0 0.0
    %1113 = vmatpush2.msra.mxu0 0.0
    %1114 = vmatprep.subr.mxu0 0.0
    %1115 = vmatpush2.msra.mxu0 0.0
    %1116 = vmatprep.subr.mxu0 0.0
    %1117 = vmatpush2.msra.mxu0 0.0
    %1118 = vmatprep.subr.mxu0 0.0
    %1119 = vmatpush2.msra.mxu0 0.0
    %1120 = vmatprep.subr.mxu0 0.0
    %1121 = vmatpush2.msra.mxu0 0.0
    %1122 = vmatprep.subr.mxu0 0.0
    %1123 = vmatpush2.msra.mxu0 0.0
    %1124 = vmatprep.subr.mxu0 0.0
    %1125 = vmatpush2.msra.mxu0 0.0
    %1126 = vmatprep.subr.mxu0 0.0
    %1127 = vmatpush2.msra.mxu0 0.0
    %1128 = vmatprep.subr.mxu0 0.0
    %1129 = vmatpush2.msra.mxu0 0.0
    %1130 = vmatprep.subr.mxu0 0.0
    %1131 = vmatpush2.msra.mxu0 0.0
    %1132 = vmatprep.subr.mxu0 0.0
    %1133 = vmatpush2.msra.mxu0 0.0
    %1134 = vmatprep.subr.mxu0 0.0
    %1135 = vmatpush2.msra.mxu0 0.0
    %1136 = vmatprep.subr.mxu0 0.0
    %1137 = vmatpush2.msra.mxu0 0.0
    %1138 = vmatprep.subr.mxu0 0.0
    %1139 = vmatpush2.msra.mxu0 0.0
    %1140 = vmatprep.mubr.f32.mxu0 0.0
    %1141 = vmatmul.mubr.f32.gmra.mxu0 %v1074
    %v1142 = vpop.f32.mrf.mxu0
    %v1143 = vadd.f32 %v1068, %v1142
    %v1144 = vpop.f32.mrf.mxu0
    %1145 = vdwg.mxu0
    %vm1146 = vcmask 25600
    %1147 = vst.msk [vmem:[#allocation6] sm:$0x3] %vm1146, %v1143
    // Predicated region
    $region34: #{tpu_custom_call.1} parent=1 // pred_check
      _
    $region35: #{tpu_custom_call.1} parent=1 // pred_check_branch
      %1149 = sbr.rel (0) target = $region37
    $region36: #{tpu_custom_call.1} parent=1 // pred_region
      %s1151 = ssub.s32 32, 32
      %1152 = vsyncadd [#allocation4], %s1151
      %s1154 = sshll.u32 [#allocation6], 4
      %s1155 = int_to_ptr.vmem [resolvable:$true] %s1154
      %1157 = dma.vmem_to_hbm [thread:$0]  %s1155, 32, %s7, [#allocation4]
    $region37: #{tpu_custom_call.1} parent=1 // pred_fallthru
      _
    // Predicated region
    $region38: #{tpu_custom_call.1} parent=1 // pred_check
      _
    $region39: #{tpu_custom_call.1} parent=1 // pred_check_branch
      %1159 = sbr.rel (0) target = $region41
    $region40: #{tpu_custom_call.1} parent=1 // pred_region
      %1160 = dma.done [#allocation4], 32
    $region41: #{tpu_custom_call.1} parent=1 // pred_fallthru
      _
    %1161 = vsyncpa [#allocation4], 1
    %1162 = vsyncpa [#allocation5], 1

</llo_original>
